<compile_context>
chip_gen: v5e
topology: v5e:2x2
jax: 0.10.0
libtpu: 0.0.40
codegen_flags: <defaults>
</compile_context>

<pallas_src>
import math
from functools import partial

import jax
import jax.numpy as jnp
from jax import lax
from jax.experimental import pallas as pl
from jax.experimental.pallas import tpu as pltpu


def _layernorm(v, gamma, beta, eps=1e-5):
    mu = jnp.mean(v, axis=-1, keepdims=True)
    var = jnp.mean((v - mu) ** 2, axis=-1, keepdims=True)
    return (v - mu) * lax.rsqrt(var + eps) * gamma + beta


def clip_layer_kernel(x_ref,
                      ln1_g_ref, ln1_b_ref,
                      wqkv_ref, bqkv_ref,
                      wo_ref, bo_ref,
                      ln2_g_ref, ln2_b_ref,
                      w1_ref, b1_ref,
                      w2_ref, b2_ref,
                      o_ref,
                      *, n_head):
    f32 = jnp.float32
    bf16 = jnp.bfloat16

    x = x_ref[0]                                   # (S, E) f32
    S, E = x.shape
    H = n_head
    D = E // H

    # ---- LayerNorm 1 (f32) ----
    xn = _layernorm(x, ln1_g_ref[...], ln1_b_ref[...])

    # ---- fused QKV projection: one full-width matmul (S,E)@(E,3E), f32 accumulation ----
    qkv = jnp.dot(xn.astype(bf16), wqkv_ref[...], preferred_element_type=f32) + bqkv_ref[...]
    qkv_bf = qkv.astype(bf16)                      # (S, 3E); columns = [Q | K | V], heads contiguous

    # ---- single (S,S) causal mask, shared by all heads ----
    row = lax.broadcasted_iota(jnp.int32, (S, S), 0)
    col = lax.broadcasted_iota(jnp.int32, (S, S), 1)
    causal = col <= row

    # ---- per-head attention + fused out_proj (head reduction accumulated in f32) ----
    dn_qkT = (((1,), (1,)), ((), ()))              # contract last dims: q @ k^T
    attn = None
    for h in range(H):
        q_h = qkv_bf[:, h * D:(h + 1) * D]                       # (S, D) bf16 (scale pre-folded)
        k_h = qkv_bf[:, E + h * D:E + (h + 1) * D]
        v_h = qkv_bf[:, 2 * E + h * D:2 * E + (h + 1) * D]

        s = lax.dot_general(q_h, k_h, dn_qkT, preferred_element_type=f32)   # (S, S) f32
        s = jnp.where(causal, s, -jnp.inf)
        m = jnp.max(s, axis=-1, keepdims=True)
        e = jnp.exp(s - m)                                        # unnormalized probs, f32
        l = jnp.sum(e, axis=-1, keepdims=True)                    # (S, 1)
        o_un = jnp.dot(e.astype(bf16), v_h, preferred_element_type=f32)     # (S, D)
        o_h = o_un * (1.0 / l)                                    # exact softmax normalization

        contrib = jnp.dot(o_h.astype(bf16), wo_ref[h], preferred_element_type=f32)  # (S, E)
        attn = contrib if attn is None else attn + contrib

    x1 = attn + bo_ref[...] + x                                   # residual 1 (f32)

    # ---- LayerNorm 2 + MLP (QuickGELU) + residual ----
    xn2 = _layernorm(x1, ln2_g_ref[...], ln2_b_ref[...])
    h1 = jnp.dot(xn2.astype(bf16), w1_ref[...], preferred_element_type=f32) + b1_ref[...]
    g = h1 * pl.reciprocal(1.0 + jnp.exp(-1.702 * h1), approx=True)   # x * sigmoid(1.702 x)
    out = jnp.dot(g.astype(bf16), w2_ref[...], preferred_element_type=f32) + b2_ref[...] + x1

    o_ref[0] = out


def _const_index_map(ndim):
    zeros = (0,) * ndim
    return lambda b: zeros


def clip_layer(x, params, n_head):
    B, S, E = x.shape
    H = n_head
    assert E % H == 0
    D = E // H
    scale = 1.0 / math.sqrt(D)
    f32, bf16 = jnp.float32, jnp.bfloat16

    # Pad the sequence (sublane) dim to a multiple of 8.  The causal mask neutralizes padded key
    # columns; padded query rows are sliced off after the call.
    S_pad = ((S + 7) // 8) * 8
    x_p = jnp.pad(x, ((0, 0), (0, S_pad - S), (0, 0))) if S_pad != S else x

    # --- weight prep (PyTorch Linear.weight is (out, in)) ---
    w_in, b_in = params["w_in"], params["b_in"]            # (3E, E), (3E,)
    col_scale = jnp.concatenate([jnp.full((E,), scale, f32), jnp.ones((2 * E,), f32)])
    w_qkv = (w_in.T * col_scale[None, :]).astype(bf16)     # (E, 3E); 1/sqrt(D) folded into Q cols
    b_qkv = (b_in * col_scale).reshape(1, 3 * E).astype(f32)

    kernel_args = [
        params["ln1_g"].reshape(1, E).astype(f32), params["ln1_b"].reshape(1, E).astype(f32),
        w_qkv, b_qkv,
        params["w_out"].T.reshape(H, D, E).astype(bf16),    # per-head out_proj slabs (H, D, E)
        params["b_out"].reshape(1, E).astype(f32),
        params["ln2_g"].reshape(1, E).astype(f32), params["ln2_b"].reshape(1, E).astype(f32),
        params["w1"].T.astype(bf16), params["b1"].reshape(1, 4 * E).astype(f32),
        params["w2"].T.astype(bf16), params["b2"].reshape(1, E).astype(f32),
    ]

    param_bytes = sum(int(a.size) * a.dtype.itemsize for a in kernel_args)
    io_block_bytes = S_pad * E * 4
    act_bytes = (S_pad * 3 * E + S_pad * 4 * E + 2 * S_pad * E) * 4 + S_pad * S_pad * 4

    # Physical VMEM per generation (v5e/v6e: 128 MiB, v7x: 64 MiB); leave ~15% compiler headroom.
    try:
        phys_vmem = int(pltpu.get_tpu_info().vmem_capacity_bytes)
    except Exception:
        phys_vmem = 64 << 20
    vmem_cap = int(phys_vmem * 0.85)

    flops = 2 * B * S_pad * (12 * E * E + 2 * S_pad * E)
    transcendentals = B * (H * S_pad * S_pad + S_pad * 4 * E)
    bytes_accessed = param_bytes + 2 * B * S_pad * E * 4
    cost = pl.CostEstimate(flops=int(flops), transcendentals=int(transcendentals),
                           bytes_accessed=int(bytes_accessed))

    def make_call(single_buffer_weights):
        weight_specs = []
        for a in kernel_args:
            idx = _const_index_map(a.ndim)
            if single_buffer_weights:
                # Constant over the grid -> single-buffer to halve the weight VMEM footprint.
                weight_specs.append(pl.BlockSpec(a.shape, idx, pipeline_mode=pl.Buffered(1)))
            else:
                weight_specs.append(pl.BlockSpec(a.shape, idx))
        weight_mult = 1 if single_buffer_weights else 2
        vmem_limit = int(min(vmem_cap,
                             weight_mult * param_bytes + 4 * io_block_bytes
                             + act_bytes + (16 << 20)))
        return pl.pallas_call(
            partial(clip_layer_kernel, n_head=H),
            out_shape=jax.ShapeDtypeStruct((B, S_pad, E), f32),
            grid=(B,),
            in_specs=[pl.BlockSpec((1, S_pad, E), lambda b: (b, 0, 0))] + weight_specs,
            out_specs=pl.BlockSpec((1, S_pad, E), lambda b: (b, 0, 0)),
            compiler_params=pltpu.CompilerParams(
                dimension_semantics=("parallel",),
                vmem_limit_bytes=vmem_limit),
            cost_estimate=cost,
        )

    try:
        out = make_call(True)(x_p, *kernel_args)
    except Exception:
        # Fallback for JAX versions where BlockSpec.pipeline_mode / pl.Buffered(1) is unsupported.
        out = make_call(False)(x_p, *kernel_args)

    return out[:, :S, :] if S_pad != S else out


def clip_layer_ref(x, params, n_head):
    """Pure-JAX f32 reference (mirrors the PyTorch forward)."""
    B, S, E = x.shape
    D = E // n_head

    def ln(v, g, b):
        mu = jnp.mean(v, -1, keepdims=True)
        var = jnp.mean((v - mu) ** 2, -1, keepdims=True)
        return (v - mu) / jnp.sqrt(var + 1e-5) * g + b

    res = x
    h = ln(x, params["ln1_g"], params["ln1_b"])
    qkv = h @ params["w_in"].T + params["b_in"]
    q, k, v = jnp.split(qkv, 3, axis=-1)
    q = q.reshape(B, S, n_head, D).transpose(0, 2, 1, 3)
    k = k.reshape(B, S, n_head, D).transpose(0, 2, 1, 3)
    v = v.reshape(B, S, n_head, D).transpose(0, 2, 1, 3)
    w = jnp.einsum("bhqd,bhkd->bhqk", q, k)
    mask = jnp.triu(jnp.ones((S, S), bool), 1)
    w = jnp.where(mask, -jnp.inf, w) / math.sqrt(D)
    w = jax.nn.softmax(w, axis=-1)
    o = jnp.einsum("bhqk,bhkd->bhqd", w, v).transpose(0, 2, 1, 3).reshape(B, S, E)
    h = o @ params["w_out"].T + params["b_out"] + res

    res = h
    h2 = ln(h, params["ln2_g"], params["ln2_b"])
    h2 = h2 @ params["w1"].T + params["b1"]
    h2 = h2 * jax.nn.sigmoid(1.702 * h2)
    return h2 @ params["w2"].T + params["b2"] + res


def init_params(key, n_embd):
    E = n_embd
    ks = jax.random.split(key, 8)
    return {
        "ln1_g": jnp.ones((E,), jnp.float32),
        "ln1_b": jnp.zeros((E,), jnp.float32),
        "w_in": 0.02 * jax.random.normal(ks[0], (3 * E, E), jnp.float32),   # PyTorch (out, in)
        "b_in": 0.02 * jax.random.normal(ks[1], (3 * E,), jnp.float32),
        "w_out": 0.02 * jax.random.normal(ks[2], (E, E), jnp.float32),
        "b_out": 0.02 * jax.random.normal(ks[3], (E,), jnp.float32),
        "ln2_g": jnp.ones((E,), jnp.float32),
        "ln2_b": jnp.zeros((E,), jnp.float32),
        "w1": 0.02 * jax.random.normal(ks[4], (4 * E, E), jnp.float32),
        "b1": 0.02 * jax.random.normal(ks[5], (4 * E,), jnp.float32),
        "w2": 0.02 * jax.random.normal(ks[6], (E, 4 * E), jnp.float32),
        "b2": 0.02 * jax.random.normal(ks[7], (E,), jnp.float32),
    }


if __name__ == "__main__":
    B, S, E, H = 2, 8, 32, 4
    key = jax.random.PRNGKey(0)
    kx, kp = jax.random.split(key)
    x = jax.random.normal(kx, (B, S, E), jnp.float32)
    params = init_params(kp, E)

    out = jax.block_until_ready(clip_layer(x, params, n_head=H))
    ref = clip_layer_ref(x, params, n_head=H)

    assert out.shape == (B, S, E)
    max_err = float(jnp.max(jnp.abs(out - ref)))
    # bf16 MXU operands + approx reciprocal (GELU gate) -> loosened tolerance vs. f32 reference.
    assert jnp.allclose(out, ref, atol=3e-2, rtol=3e-2), max_err

    print("KERNEL_OK")
</pallas_src>

<mosaic_0001>
module attributes {stable_mosaic.version = 11 : i64} {
  func.func @clip_layer_kernel(%arg0: i32, %arg1: memref<1x8x32xf32, #tpu.memory_space<vmem>>, %arg2: memref<1x32xf32, #tpu.memory_space<vmem>>, %arg3: memref<1x32xf32, #tpu.memory_space<vmem>>, %arg4: memref<32x96xbf16, #tpu.memory_space<vmem>>, %arg5: memref<1x96xf32, #tpu.memory_space<vmem>>, %arg6: memref<4x8x32xbf16, #tpu.memory_space<vmem>>, %arg7: memref<1x32xf32, #tpu.memory_space<vmem>>, %arg8: memref<1x32xf32, #tpu.memory_space<vmem>>, %arg9: memref<1x32xf32, #tpu.memory_space<vmem>>, %arg10: memref<32x128xbf16, #tpu.memory_space<vmem>>, %arg11: memref<1x128xf32, #tpu.memory_space<vmem>>, %arg12: memref<128x32xbf16, #tpu.memory_space<vmem>>, %arg13: memref<1x32xf32, #tpu.memory_space<vmem>>, %arg14: memref<1x8x32xf32, #tpu.memory_space<vmem>>) attributes {dimension_semantics = [#tpu.dimension_semantics<parallel>], iteration_bounds = array<i64: 2>, scalar_prefetch = 0 : i64, scratch_operands = 0 : i64, tpu.core_type = #tpu.core_type<tc>, window_params = [{transform_indices = @transform_0, window_bounds = array<i64: 1, 8, 32>}, {pipeline_mode = #tpu.pipeline_mode<synchronous>, transform_indices = @transform_1, window_bounds = array<i64: 1, 32>}, {pipeline_mode = #tpu.pipeline_mode<synchronous>, transform_indices = @transform_2, window_bounds = array<i64: 1, 32>}, {pipeline_mode = #tpu.pipeline_mode<synchronous>, transform_indices = @transform_3, window_bounds = array<i64: 32, 96>}, {pipeline_mode = #tpu.pipeline_mode<synchronous>, transform_indices = @transform_4, window_bounds = array<i64: 1, 96>}, {pipeline_mode = #tpu.pipeline_mode<synchronous>, transform_indices = @transform_5, window_bounds = array<i64: 4, 8, 32>}, {pipeline_mode = #tpu.pipeline_mode<synchronous>, transform_indices = @transform_6, window_bounds = array<i64: 1, 32>}, {pipeline_mode = #tpu.pipeline_mode<synchronous>, transform_indices = @transform_7, window_bounds = array<i64: 1, 32>}, {pipeline_mode = #tpu.pipeline_mode<synchronous>, transform_indices = @transform_8, window_bounds = array<i64: 1, 32>}, {pipeline_mode = #tpu.pipeline_mode<synchronous>, transform_indices = @transform_9, window_bounds = array<i64: 32, 128>}, {pipeline_mode = #tpu.pipeline_mode<synchronous>, transform_indices = @transform_10, window_bounds = array<i64: 1, 128>}, {pipeline_mode = #tpu.pipeline_mode<synchronous>, transform_indices = @transform_11, window_bounds = array<i64: 128, 32>}, {pipeline_mode = #tpu.pipeline_mode<synchronous>, transform_indices = @transform_12, window_bounds = array<i64: 1, 32>}, {transform_indices = @transform_13, window_bounds = array<i64: 1, 8, 32>}]} {
    %c0 = arith.constant 0 : index
    %c0_0 = arith.constant 0 : index
    %c0_1 = arith.constant 0 : index
    %0 = vector.load %arg1[%c0, %c0_0, %c0_1] : memref<1x8x32xf32, #tpu.memory_space<vmem>>, vector<1x8x32xf32>
    %1 = vector.shape_cast %0 : vector<1x8x32xf32> to vector<8x32xf32>
    %c0_2 = arith.constant 0 : index
    %c0_3 = arith.constant 0 : index
    %2 = vector.load %arg2[%c0_2, %c0_3] : memref<1x32xf32, #tpu.memory_space<vmem>>, vector<1x32xf32>
    %c0_4 = arith.constant 0 : index
    %c0_5 = arith.constant 0 : index
    %3 = vector.load %arg3[%c0_4, %c0_5] : memref<1x32xf32, #tpu.memory_space<vmem>>, vector<1x32xf32>
    %cst = arith.constant dense<0.000000e+00> : vector<8xf32>
    %4 = vector.multi_reduction <add>, %1, %cst [1] : vector<8x32xf32> to vector<8xf32>
    %5 = vector.shape_cast %4 : vector<8xf32> to vector<8x1xf32>
    %cst_6 = arith.constant 3.200000e+01 : f32
    %6 = vector.broadcast %cst_6 : f32 to vector<8x1xf32>
    %7 = arith.divf %5, %6 : vector<8x1xf32>
    %8 = vector.broadcast %7 : vector<8x1xf32> to vector<8x32xf32>
    %9 = arith.subf %1, %8 : vector<8x32xf32>
    %10 = arith.mulf %9, %9 : vector<8x32xf32>
    %cst_7 = arith.constant dense<0.000000e+00> : vector<8xf32>
    %11 = vector.multi_reduction <add>, %10, %cst_7 [1] : vector<8x32xf32> to vector<8xf32>
    %12 = vector.shape_cast %11 : vector<8xf32> to vector<8x1xf32>
    %cst_8 = arith.constant 3.200000e+01 : f32
    %13 = vector.broadcast %cst_8 : f32 to vector<8x1xf32>
    %14 = arith.divf %12, %13 : vector<8x1xf32>
    %15 = vector.broadcast %7 : vector<8x1xf32> to vector<8x32xf32>
    %16 = arith.subf %1, %15 : vector<8x32xf32>
    %cst_9 = arith.constant 9.99999974E-6 : f32
    %17 = vector.broadcast %cst_9 : f32 to vector<8x1xf32>
    %18 = arith.addf %14, %17 : vector<8x1xf32>
    %19 = math.rsqrt %18 : vector<8x1xf32>
    %20 = vector.broadcast %19 : vector<8x1xf32> to vector<8x32xf32>
    %21 = arith.mulf %16, %20 : vector<8x32xf32>
    %22 = vector.broadcast %2 : vector<1x32xf32> to vector<8x32xf32>
    %23 = arith.mulf %21, %22 : vector<8x32xf32>
    %24 = vector.broadcast %3 : vector<1x32xf32> to vector<8x32xf32>
    %25 = arith.addf %23, %24 : vector<8x32xf32>
    %26 = arith.truncf %25 : vector<8x32xf32> to vector<8x32xbf16>
    %c0_10 = arith.constant 0 : index
    %c0_11 = arith.constant 0 : index
    %27 = vector.load %arg4[%c0_10, %c0_11] : memref<32x96xbf16, #tpu.memory_space<vmem>>, vector<32x96xbf16>
    %cst_12 = arith.constant dense<0.000000e+00> : vector<8x96xf32>
    %28 = tpu.matmul %26, %27, %cst_12 {dimension_numbers = #tpu.dot_dimension_numbers<[1], [0], [0], [1], [0, 0, 1, 1], [], []>} : vector<8x32xbf16>, vector<32x96xbf16>, vector<8x96xf32> -> vector<8x96xf32>
    %c0_13 = arith.constant 0 : index
    %c0_14 = arith.constant 0 : index
    %29 = vector.load %arg5[%c0_13, %c0_14] : memref<1x96xf32, #tpu.memory_space<vmem>>, vector<1x96xf32>
    %30 = vector.broadcast %29 : vector<1x96xf32> to vector<8x96xf32>
    %31 = arith.addf %28, %30 : vector<8x96xf32>
    %32 = arith.truncf %31 : vector<8x96xf32> to vector<8x96xbf16>
    %33 = tpu.iota {dimensions = array<i32: 0>} : vector<8x8xi32>
    %34 = tpu.iota {dimensions = array<i32: 1>} : vector<8x8xi32>
    %35 = arith.cmpi sle, %34, %33 : vector<8x8xi32>
    %36 = vector.extract_strided_slice %32 {offsets = [0, 0], sizes = [8, 8], strides = [1, 1]} : vector<8x96xbf16> to vector<8x8xbf16>
    %37 = vector.extract_strided_slice %32 {offsets = [0, 32], sizes = [8, 8], strides = [1, 1]} : vector<8x96xbf16> to vector<8x8xbf16>
    %38 = vector.extract_strided_slice %32 {offsets = [0, 64], sizes = [8, 8], strides = [1, 1]} : vector<8x96xbf16> to vector<8x8xbf16>
    %cst_15 = arith.constant dense<0.000000e+00> : vector<8x8xf32>
    %39 = tpu.matmul %36, %37, %cst_15 {dimension_numbers = #tpu.dot_dimension_numbers<[1], [1], [0], [0], [0, 0, 1, 0], [], []>} : vector<8x8xbf16>, vector<8x8xbf16>, vector<8x8xf32> -> vector<8x8xf32>
    %cst_16 = arith.constant 0xFF800000 : f32
    %40 = vector.broadcast %cst_16 : f32 to vector<8x8xf32>
    %41 = arith.select %35, %39, %40 : vector<8x8xi1>, vector<8x8xf32>
    %cst_17 = arith.constant dense<0xFF800000> : vector<8xf32>
    %42 = vector.multi_reduction <maximumf>, %41, %cst_17 [1] : vector<8x8xf32> to vector<8xf32>
    %43 = vector.shape_cast %42 : vector<8xf32> to vector<8x1xf32>
    %44 = vector.broadcast %43 : vector<8x1xf32> to vector<8x8xf32>
    %45 = arith.subf %41, %44 : vector<8x8xf32>
    %46 = math.exp %45 : vector<8x8xf32>
    %cst_18 = arith.constant dense<0.000000e+00> : vector<8xf32>
    %47 = vector.multi_reduction <add>, %46, %cst_18 [1] : vector<8x8xf32> to vector<8xf32>
    %48 = vector.shape_cast %47 : vector<8xf32> to vector<8x1xf32>
    %49 = arith.truncf %46 : vector<8x8xf32> to vector<8x8xbf16>
    %cst_19 = arith.constant dense<0.000000e+00> : vector<8x8xf32>
    %50 = tpu.matmul %49, %38, %cst_19 {dimension_numbers = #tpu.dot_dimension_numbers<[1], [0], [0], [1], [0, 0, 1, 1], [], []>} : vector<8x8xbf16>, vector<8x8xbf16>, vector<8x8xf32> -> vector<8x8xf32>
    %cst_20 = arith.constant 1.000000e+00 : f32
    %51 = vector.broadcast %cst_20 : f32 to vector<8x1xf32>
    %52 = arith.divf %51, %48 : vector<8x1xf32>
    %53 = vector.broadcast %52 : vector<8x1xf32> to vector<8x8xf32>
    %54 = arith.mulf %50, %53 : vector<8x8xf32>
    %55 = arith.truncf %54 : vector<8x8xf32> to vector<8x8xbf16>
    %c0_21 = arith.constant 0 : index
    %c0_22 = arith.constant 0 : index
    %c0_23 = arith.constant 0 : index
    %56 = vector.load %arg6[%c0_21, %c0_22, %c0_23] : memref<4x8x32xbf16, #tpu.memory_space<vmem>>, vector<1x8x32xbf16>
    %57 = vector.shape_cast %56 : vector<1x8x32xbf16> to vector<8x32xbf16>
    %cst_24 = arith.constant dense<0.000000e+00> : vector<8x32xf32>
    %58 = tpu.matmul %55, %57, %cst_24 {dimension_numbers = #tpu.dot_dimension_numbers<[1], [0], [0], [1], [0, 0, 1, 1], [], []>} : vector<8x8xbf16>, vector<8x32xbf16>, vector<8x32xf32> -> vector<8x32xf32>
    %59 = vector.extract_strided_slice %32 {offsets = [0, 8], sizes = [8, 8], strides = [1, 1]} : vector<8x96xbf16> to vector<8x8xbf16>
    %60 = vector.extract_strided_slice %32 {offsets = [0, 40], sizes = [8, 8], strides = [1, 1]} : vector<8x96xbf16> to vector<8x8xbf16>
    %61 = vector.extract_strided_slice %32 {offsets = [0, 72], sizes = [8, 8], strides = [1, 1]} : vector<8x96xbf16> to vector<8x8xbf16>
    %cst_25 = arith.constant dense<0.000000e+00> : vector<8x8xf32>
    %62 = tpu.matmul %59, %60, %cst_25 {dimension_numbers = #tpu.dot_dimension_numbers<[1], [1], [0], [0], [0, 0, 1, 0], [], []>} : vector<8x8xbf16>, vector<8x8xbf16>, vector<8x8xf32> -> vector<8x8xf32>
    %cst_26 = arith.constant 0xFF800000 : f32
    %63 = vector.broadcast %cst_26 : f32 to vector<8x8xf32>
    %64 = arith.select %35, %62, %63 : vector<8x8xi1>, vector<8x8xf32>
    %cst_27 = arith.constant dense<0xFF800000> : vector<8xf32>
    %65 = vector.multi_reduction <maximumf>, %64, %cst_27 [1] : vector<8x8xf32> to vector<8xf32>
    %66 = vector.shape_cast %65 : vector<8xf32> to vector<8x1xf32>
    %67 = vector.broadcast %66 : vector<8x1xf32> to vector<8x8xf32>
    %68 = arith.subf %64, %67 : vector<8x8xf32>
    %69 = math.exp %68 : vector<8x8xf32>
    %cst_28 = arith.constant dense<0.000000e+00> : vector<8xf32>
    %70 = vector.multi_reduction <add>, %69, %cst_28 [1] : vector<8x8xf32> to vector<8xf32>
    %71 = vector.shape_cast %70 : vector<8xf32> to vector<8x1xf32>
    %72 = arith.truncf %69 : vector<8x8xf32> to vector<8x8xbf16>
    %cst_29 = arith.constant dense<0.000000e+00> : vector<8x8xf32>
    %73 = tpu.matmul %72, %61, %cst_29 {dimension_numbers = #tpu.dot_dimension_numbers<[1], [0], [0], [1], [0, 0, 1, 1], [], []>} : vector<8x8xbf16>, vector<8x8xbf16>, vector<8x8xf32> -> vector<8x8xf32>
    %cst_30 = arith.constant 1.000000e+00 : f32
    %74 = vector.broadcast %cst_30 : f32 to vector<8x1xf32>
    %75 = arith.divf %74, %71 : vector<8x1xf32>
    %76 = vector.broadcast %75 : vector<8x1xf32> to vector<8x8xf32>
    %77 = arith.mulf %73, %76 : vector<8x8xf32>
    %78 = arith.truncf %77 : vector<8x8xf32> to vector<8x8xbf16>
    %c1 = arith.constant 1 : index
    %c0_31 = arith.constant 0 : index
    %c0_32 = arith.constant 0 : index
    %79 = vector.load %arg6[%c1, %c0_31, %c0_32] : memref<4x8x32xbf16, #tpu.memory_space<vmem>>, vector<1x8x32xbf16>
    %80 = vector.shape_cast %79 : vector<1x8x32xbf16> to vector<8x32xbf16>
    %cst_33 = arith.constant dense<0.000000e+00> : vector<8x32xf32>
    %81 = tpu.matmul %78, %80, %cst_33 {dimension_numbers = #tpu.dot_dimension_numbers<[1], [0], [0], [1], [0, 0, 1, 1], [], []>} : vector<8x8xbf16>, vector<8x32xbf16>, vector<8x32xf32> -> vector<8x32xf32>
    %82 = arith.addf %58, %81 : vector<8x32xf32>
    %83 = vector.extract_strided_slice %32 {offsets = [0, 16], sizes = [8, 8], strides = [1, 1]} : vector<8x96xbf16> to vector<8x8xbf16>
    %84 = vector.extract_strided_slice %32 {offsets = [0, 48], sizes = [8, 8], strides = [1, 1]} : vector<8x96xbf16> to vector<8x8xbf16>
    %85 = vector.extract_strided_slice %32 {offsets = [0, 80], sizes = [8, 8], strides = [1, 1]} : vector<8x96xbf16> to vector<8x8xbf16>
    %cst_34 = arith.constant dense<0.000000e+00> : vector<8x8xf32>
    %86 = tpu.matmul %83, %84, %cst_34 {dimension_numbers = #tpu.dot_dimension_numbers<[1], [1], [0], [0], [0, 0, 1, 0], [], []>} : vector<8x8xbf16>, vector<8x8xbf16>, vector<8x8xf32> -> vector<8x8xf32>
    %cst_35 = arith.constant 0xFF800000 : f32
    %87 = vector.broadcast %cst_35 : f32 to vector<8x8xf32>
    %88 = arith.select %35, %86, %87 : vector<8x8xi1>, vector<8x8xf32>
    %cst_36 = arith.constant dense<0xFF800000> : vector<8xf32>
    %89 = vector.multi_reduction <maximumf>, %88, %cst_36 [1] : vector<8x8xf32> to vector<8xf32>
    %90 = vector.shape_cast %89 : vector<8xf32> to vector<8x1xf32>
    %91 = vector.broadcast %90 : vector<8x1xf32> to vector<8x8xf32>
    %92 = arith.subf %88, %91 : vector<8x8xf32>
    %93 = math.exp %92 : vector<8x8xf32>
    %cst_37 = arith.constant dense<0.000000e+00> : vector<8xf32>
    %94 = vector.multi_reduction <add>, %93, %cst_37 [1] : vector<8x8xf32> to vector<8xf32>
    %95 = vector.shape_cast %94 : vector<8xf32> to vector<8x1xf32>
    %96 = arith.truncf %93 : vector<8x8xf32> to vector<8x8xbf16>
    %cst_38 = arith.constant dense<0.000000e+00> : vector<8x8xf32>
    %97 = tpu.matmul %96, %85, %cst_38 {dimension_numbers = #tpu.dot_dimension_numbers<[1], [0], [0], [1], [0, 0, 1, 1], [], []>} : vector<8x8xbf16>, vector<8x8xbf16>, vector<8x8xf32> -> vector<8x8xf32>
    %cst_39 = arith.constant 1.000000e+00 : f32
    %98 = vector.broadcast %cst_39 : f32 to vector<8x1xf32>
    %99 = arith.divf %98, %95 : vector<8x1xf32>
    %100 = vector.broadcast %99 : vector<8x1xf32> to vector<8x8xf32>
    %101 = arith.mulf %97, %100 : vector<8x8xf32>
    %102 = arith.truncf %101 : vector<8x8xf32> to vector<8x8xbf16>
    %c2 = arith.constant 2 : index
    %c0_40 = arith.constant 0 : index
    %c0_41 = arith.constant 0 : index
    %103 = vector.load %arg6[%c2, %c0_40, %c0_41] : memref<4x8x32xbf16, #tpu.memory_space<vmem>>, vector<1x8x32xbf16>
    %104 = vector.shape_cast %103 : vector<1x8x32xbf16> to vector<8x32xbf16>
    %cst_42 = arith.constant dense<0.000000e+00> : vector<8x32xf32>
    %105 = tpu.matmul %102, %104, %cst_42 {dimension_numbers = #tpu.dot_dimension_numbers<[1], [0], [0], [1], [0, 0, 1, 1], [], []>} : vector<8x8xbf16>, vector<8x32xbf16>, vector<8x32xf32> -> vector<8x32xf32>
    %106 = arith.addf %82, %105 : vector<8x32xf32>
    %107 = vector.extract_strided_slice %32 {offsets = [0, 24], sizes = [8, 8], strides = [1, 1]} : vector<8x96xbf16> to vector<8x8xbf16>
    %108 = vector.extract_strided_slice %32 {offsets = [0, 56], sizes = [8, 8], strides = [1, 1]} : vector<8x96xbf16> to vector<8x8xbf16>
    %109 = vector.extract_strided_slice %32 {offsets = [0, 88], sizes = [8, 8], strides = [1, 1]} : vector<8x96xbf16> to vector<8x8xbf16>
    %cst_43 = arith.constant dense<0.000000e+00> : vector<8x8xf32>
    %110 = tpu.matmul %107, %108, %cst_43 {dimension_numbers = #tpu.dot_dimension_numbers<[1], [1], [0], [0], [0, 0, 1, 0], [], []>} : vector<8x8xbf16>, vector<8x8xbf16>, vector<8x8xf32> -> vector<8x8xf32>
    %cst_44 = arith.constant 0xFF800000 : f32
    %111 = vector.broadcast %cst_44 : f32 to vector<8x8xf32>
    %112 = arith.select %35, %110, %111 : vector<8x8xi1>, vector<8x8xf32>
    %cst_45 = arith.constant dense<0xFF800000> : vector<8xf32>
    %113 = vector.multi_reduction <maximumf>, %112, %cst_45 [1] : vector<8x8xf32> to vector<8xf32>
    %114 = vector.shape_cast %113 : vector<8xf32> to vector<8x1xf32>
    %115 = vector.broadcast %114 : vector<8x1xf32> to vector<8x8xf32>
    %116 = arith.subf %112, %115 : vector<8x8xf32>
    %117 = math.exp %116 : vector<8x8xf32>
    %cst_46 = arith.constant dense<0.000000e+00> : vector<8xf32>
    %118 = vector.multi_reduction <add>, %117, %cst_46 [1] : vector<8x8xf32> to vector<8xf32>
    %119 = vector.shape_cast %118 : vector<8xf32> to vector<8x1xf32>
    %120 = arith.truncf %117 : vector<8x8xf32> to vector<8x8xbf16>
    %cst_47 = arith.constant dense<0.000000e+00> : vector<8x8xf32>
    %121 = tpu.matmul %120, %109, %cst_47 {dimension_numbers = #tpu.dot_dimension_numbers<[1], [0], [0], [1], [0, 0, 1, 1], [], []>} : vector<8x8xbf16>, vector<8x8xbf16>, vector<8x8xf32> -> vector<8x8xf32>
    %cst_48 = arith.constant 1.000000e+00 : f32
    %122 = vector.broadcast %cst_48 : f32 to vector<8x1xf32>
    %123 = arith.divf %122, %119 : vector<8x1xf32>
    %124 = vector.broadcast %123 : vector<8x1xf32> to vector<8x8xf32>
    %125 = arith.mulf %121, %124 : vector<8x8xf32>
    %126 = arith.truncf %125 : vector<8x8xf32> to vector<8x8xbf16>
    %c3 = arith.constant 3 : index
    %c0_49 = arith.constant 0 : index
    %c0_50 = arith.constant 0 : index
    %127 = vector.load %arg6[%c3, %c0_49, %c0_50] : memref<4x8x32xbf16, #tpu.memory_space<vmem>>, vector<1x8x32xbf16>
    %128 = vector.shape_cast %127 : vector<1x8x32xbf16> to vector<8x32xbf16>
    %cst_51 = arith.constant dense<0.000000e+00> : vector<8x32xf32>
    %129 = tpu.matmul %126, %128, %cst_51 {dimension_numbers = #tpu.dot_dimension_numbers<[1], [0], [0], [1], [0, 0, 1, 1], [], []>} : vector<8x8xbf16>, vector<8x32xbf16>, vector<8x32xf32> -> vector<8x32xf32>
    %130 = arith.addf %106, %129 : vector<8x32xf32>
    %c0_52 = arith.constant 0 : index
    %c0_53 = arith.constant 0 : index
    %131 = vector.load %arg7[%c0_52, %c0_53] : memref<1x32xf32, #tpu.memory_space<vmem>>, vector<1x32xf32>
    %132 = vector.broadcast %131 : vector<1x32xf32> to vector<8x32xf32>
    %133 = arith.addf %130, %132 : vector<8x32xf32>
    %134 = arith.addf %133, %1 : vector<8x32xf32>
    %c0_54 = arith.constant 0 : index
    %c0_55 = arith.constant 0 : index
    %135 = vector.load %arg8[%c0_54, %c0_55] : memref<1x32xf32, #tpu.memory_space<vmem>>, vector<1x32xf32>
    %c0_56 = arith.constant 0 : index
    %c0_57 = arith.constant 0 : index
    %136 = vector.load %arg9[%c0_56, %c0_57] : memref<1x32xf32, #tpu.memory_space<vmem>>, vector<1x32xf32>
    %cst_58 = arith.constant dense<0.000000e+00> : vector<8xf32>
    %137 = vector.multi_reduction <add>, %134, %cst_58 [1] : vector<8x32xf32> to vector<8xf32>
    %138 = vector.shape_cast %137 : vector<8xf32> to vector<8x1xf32>
    %cst_59 = arith.constant 3.200000e+01 : f32
    %139 = vector.broadcast %cst_59 : f32 to vector<8x1xf32>
    %140 = arith.divf %138, %139 : vector<8x1xf32>
    %141 = vector.broadcast %140 : vector<8x1xf32> to vector<8x32xf32>
    %142 = arith.subf %134, %141 : vector<8x32xf32>
    %143 = arith.mulf %142, %142 : vector<8x32xf32>
    %cst_60 = arith.constant dense<0.000000e+00> : vector<8xf32>
    %144 = vector.multi_reduction <add>, %143, %cst_60 [1] : vector<8x32xf32> to vector<8xf32>
    %145 = vector.shape_cast %144 : vector<8xf32> to vector<8x1xf32>
    %cst_61 = arith.constant 3.200000e+01 : f32
    %146 = vector.broadcast %cst_61 : f32 to vector<8x1xf32>
    %147 = arith.divf %145, %146 : vector<8x1xf32>
    %148 = vector.broadcast %140 : vector<8x1xf32> to vector<8x32xf32>
    %149 = arith.subf %134, %148 : vector<8x32xf32>
    %cst_62 = arith.constant 9.99999974E-6 : f32
    %150 = vector.broadcast %cst_62 : f32 to vector<8x1xf32>
    %151 = arith.addf %147, %150 : vector<8x1xf32>
    %152 = math.rsqrt %151 : vector<8x1xf32>
    %153 = vector.broadcast %152 : vector<8x1xf32> to vector<8x32xf32>
    %154 = arith.mulf %149, %153 : vector<8x32xf32>
    %155 = vector.broadcast %135 : vector<1x32xf32> to vector<8x32xf32>
    %156 = arith.mulf %154, %155 : vector<8x32xf32>
    %157 = vector.broadcast %136 : vector<1x32xf32> to vector<8x32xf32>
    %158 = arith.addf %156, %157 : vector<8x32xf32>
    %159 = arith.truncf %158 : vector<8x32xf32> to vector<8x32xbf16>
    %c0_63 = arith.constant 0 : index
    %c0_64 = arith.constant 0 : index
    %160 = vector.load %arg10[%c0_63, %c0_64] : memref<32x128xbf16, #tpu.memory_space<vmem>>, vector<32x128xbf16>
    %cst_65 = arith.constant dense<0.000000e+00> : vector<8x128xf32>
    %161 = tpu.matmul %159, %160, %cst_65 {dimension_numbers = #tpu.dot_dimension_numbers<[1], [0], [0], [1], [0, 0, 1, 1], [], []>} : vector<8x32xbf16>, vector<32x128xbf16>, vector<8x128xf32> -> vector<8x128xf32>
    %c0_66 = arith.constant 0 : index
    %c0_67 = arith.constant 0 : index
    %162 = vector.load %arg11[%c0_66, %c0_67] : memref<1x128xf32, #tpu.memory_space<vmem>>, vector<1x128xf32>
    %163 = vector.broadcast %162 : vector<1x128xf32> to vector<8x128xf32>
    %164 = arith.addf %161, %163 : vector<8x128xf32>
    %cst_68 = arith.constant -1.702000e+00 : f32
    %165 = vector.broadcast %cst_68 : f32 to vector<8x128xf32>
    %166 = arith.mulf %165, %164 : vector<8x128xf32>
    %167 = math.exp %166 : vector<8x128xf32>
    %cst_69 = arith.constant 1.000000e+00 : f32
    %168 = vector.broadcast %cst_69 : f32 to vector<8x128xf32>
    %169 = arith.addf %168, %167 : vector<8x128xf32>
    %170 = tpu.reciprocal %169 {approx = true} : vector<8x128xf32> -> vector<8x128xf32>
    %171 = arith.mulf %164, %170 : vector<8x128xf32>
    %172 = arith.truncf %171 : vector<8x128xf32> to vector<8x128xbf16>
    %c0_70 = arith.constant 0 : index
    %c0_71 = arith.constant 0 : index
    %173 = vector.load %arg12[%c0_70, %c0_71] : memref<128x32xbf16, #tpu.memory_space<vmem>>, vector<128x32xbf16>
    %cst_72 = arith.constant dense<0.000000e+00> : vector<8x32xf32>
    %174 = tpu.matmul %172, %173, %cst_72 {dimension_numbers = #tpu.dot_dimension_numbers<[1], [0], [0], [1], [0, 0, 1, 1], [], []>} : vector<8x128xbf16>, vector<128x32xbf16>, vector<8x32xf32> -> vector<8x32xf32>
    %c0_73 = arith.constant 0 : index
    %c0_74 = arith.constant 0 : index
    %175 = vector.load %arg13[%c0_73, %c0_74] : memref<1x32xf32, #tpu.memory_space<vmem>>, vector<1x32xf32>
    %176 = vector.broadcast %175 : vector<1x32xf32> to vector<8x32xf32>
    %177 = arith.addf %174, %176 : vector<8x32xf32>
    %178 = arith.addf %177, %134 : vector<8x32xf32>
    %c0_75 = arith.constant 0 : index
    %c0_76 = arith.constant 0 : index
    %c0_77 = arith.constant 0 : index
    %179 = vector.load %arg14[%c0_75, %c0_76, %c0_77] : memref<1x8x32xf32, #tpu.memory_space<vmem>>, vector<1x8x32xf32>
    %180 = vector.shape_cast %179 : vector<1x8x32xf32> to vector<8x32xf32>
    %181 = vector.shape_cast %178 : vector<8x32xf32> to vector<1x8x32xf32>
    tpu.vector_store %arg14[%c0_75, %c0_76, %c0_77], %181 {strides = array<i32>} : memref<1x8x32xf32, #tpu.memory_space<vmem>>, vector<1x8x32xf32>,
    return
  }
  func.func @transform_0(%arg0: i32) -> (i32, i32, i32) {
    %c0_i32 = arith.constant 0 : i32
    %c0_i32_0 = arith.constant 0 : i32
    %c0_i32_1 = arith.constant 0 : i32
    return %arg0, %c0_i32, %c0_i32_0 : i32, i32, i32
  }
  func.func @transform_1(%arg0: i32) -> (i32, i32) {
    %c0_i32 = arith.constant 0 : i32
    %c0_i32_0 = arith.constant 0 : i32
    %c0_i32_1 = arith.constant 0 : i32
    return %c0_i32, %c0_i32_0 : i32, i32
  }
  func.func @transform_2(%arg0: i32) -> (i32, i32) {
    %c0_i32 = arith.constant 0 : i32
    %c0_i32_0 = arith.constant 0 : i32
    %c0_i32_1 = arith.constant 0 : i32
    return %c0_i32, %c0_i32_0 : i32, i32
  }
  func.func @transform_3(%arg0: i32) -> (i32, i32) {
    %c0_i32 = arith.constant 0 : i32
    %c0_i32_0 = arith.constant 0 : i32
    %c0_i32_1 = arith.constant 0 : i32
    return %c0_i32, %c0_i32_0 : i32, i32
  }
  func.func @transform_4(%arg0: i32) -> (i32, i32) {
    %c0_i32 = arith.constant 0 : i32
    %c0_i32_0 = arith.constant 0 : i32
    %c0_i32_1 = arith.constant 0 : i32
    return %c0_i32, %c0_i32_0 : i32, i32
  }
  func.func @transform_5(%arg0: i32) -> (i32, i32, i32) {
    %c0_i32 = arith.constant 0 : i32
    %c0_i32_0 = arith.constant 0 : i32
    %c0_i32_1 = arith.constant 0 : i32
    %c0_i32_2 = arith.constant 0 : i32
    return %c0_i32, %c0_i32_0, %c0_i32_1 : i32, i32, i32
  }
  func.func @transform_6(%arg0: i32) -> (i32, i32) {
    %c0_i32 = arith.constant 0 : i32
    %c0_i32_0 = arith.constant 0 : i32
    %c0_i32_1 = arith.constant 0 : i32
    return %c0_i32, %c0_i32_0 : i32, i32
  }
  func.func @transform_7(%arg0: i32) -> (i32, i32) {
    %c0_i32 = arith.constant 0 : i32
    %c0_i32_0 = arith.constant 0 : i32
    %c0_i32_1 = arith.constant 0 : i32
    return %c0_i32, %c0_i32_0 : i32, i32
  }
  func.func @transform_8(%arg0: i32) -> (i32, i32) {
    %c0_i32 = arith.constant 0 : i32
    %c0_i32_0 = arith.constant 0 : i32
    %c0_i32_1 = arith.constant 0 : i32
    return %c0_i32, %c0_i32_0 : i32, i32
  }
  func.func @transform_9(%arg0: i32) -> (i32, i32) {
    %c0_i32 = arith.constant 0 : i32
    %c0_i32_0 = arith.constant 0 : i32
    %c0_i32_1 = arith.constant 0 : i32
    return %c0_i32, %c0_i32_0 : i32, i32
  }
  func.func @transform_10(%arg0: i32) -> (i32, i32) {
    %c0_i32 = arith.constant 0 : i32
    %c0_i32_0 = arith.constant 0 : i32
    %c0_i32_1 = arith.constant 0 : i32
    return %c0_i32, %c0_i32_0 : i32, i32
  }
  func.func @transform_11(%arg0: i32) -> (i32, i32) {
    %c0_i32 = arith.constant 0 : i32
    %c0_i32_0 = arith.constant 0 : i32
    %c0_i32_1 = arith.constant 0 : i32
    return %c0_i32, %c0_i32_0 : i32, i32
  }
  func.func @transform_12(%arg0: i32) -> (i32, i32) {
    %c0_i32 = arith.constant 0 : i32
    %c0_i32_0 = arith.constant 0 : i32
    %c0_i32_1 = arith.constant 0 : i32
    return %c0_i32, %c0_i32_0 : i32, i32
  }
  func.func @transform_13(%arg0: i32) -> (i32, i32, i32) {
    %c0_i32 = arith.constant 0 : i32
    %c0_i32_0 = arith.constant 0 : i32
    %c0_i32_1 = arith.constant 0 : i32
    return %arg0, %c0_i32, %c0_i32_0 : i32, i32, i32
  }
}

module attributes {stable_mosaic.version = 11 : i64} {
  func.func @clip_layer_kernel(%arg0: i32, %arg1: memref<1x8x32xf32, #tpu.memory_space<vmem>>, %arg2: memref<1x32xf32, #tpu.memory_space<vmem>>, %arg3: memref<1x32xf32, #tpu.memory_space<vmem>>, %arg4: memref<32x96xbf16, #tpu.memory_space<vmem>>, %arg5: memref<1x96xf32, #tpu.memory_space<vmem>>, %arg6: memref<4x8x32xbf16, #tpu.memory_space<vmem>>, %arg7: memref<1x32xf32, #tpu.memory_space<vmem>>, %arg8: memref<1x32xf32, #tpu.memory_space<vmem>>, %arg9: memref<1x32xf32, #tpu.memory_space<vmem>>, %arg10: memref<32x128xbf16, #tpu.memory_space<vmem>>, %arg11: memref<1x128xf32, #tpu.memory_space<vmem>>, %arg12: memref<128x32xbf16, #tpu.memory_space<vmem>>, %arg13: memref<1x32xf32, #tpu.memory_space<vmem>>, %arg14: memref<1x8x32xf32, #tpu.memory_space<vmem>>) attributes {dimension_semantics = [#tpu.dimension_semantics<parallel>], iteration_bounds = array<i64: 2>, scalar_prefetch = 0 : i64, scratch_operands = 0 : i64, tpu.core_type = #tpu.core_type<tc>, window_params = [{transform_indices = @transform_0, window_bounds = array<i64: 1, 8, 32>}, {pipeline_mode = #tpu.pipeline_mode<synchronous>, transform_indices = @transform_1, window_bounds = array<i64: 1, 32>}, {pipeline_mode = #tpu.pipeline_mode<synchronous>, transform_indices = @transform_2, window_bounds = array<i64: 1, 32>}, {pipeline_mode = #tpu.pipeline_mode<synchronous>, transform_indices = @transform_3, window_bounds = array<i64: 32, 96>}, {pipeline_mode = #tpu.pipeline_mode<synchronous>, transform_indices = @transform_4, window_bounds = array<i64: 1, 96>}, {pipeline_mode = #tpu.pipeline_mode<synchronous>, transform_indices = @transform_5, window_bounds = array<i64: 4, 8, 32>}, {pipeline_mode = #tpu.pipeline_mode<synchronous>, transform_indices = @transform_6, window_bounds = array<i64: 1, 32>}, {pipeline_mode = #tpu.pipeline_mode<synchronous>, transform_indices = @transform_7, window_bounds = array<i64: 1, 32>}, {pipeline_mode = #tpu.pipeline_mode<synchronous>, transform_indices = @transform_8, window_bounds = array<i64: 1, 32>}, {pipeline_mode = #tpu.pipeline_mode<synchronous>, transform_indices = @transform_9, window_bounds = array<i64: 32, 128>}, {pipeline_mode = #tpu.pipeline_mode<synchronous>, transform_indices = @transform_10, window_bounds = array<i64: 1, 128>}, {pipeline_mode = #tpu.pipeline_mode<synchronous>, transform_indices = @transform_11, window_bounds = array<i64: 128, 32>}, {pipeline_mode = #tpu.pipeline_mode<synchronous>, transform_indices = @transform_12, window_bounds = array<i64: 1, 32>}, {transform_indices = @transform_13, window_bounds = array<i64: 1, 8, 32>}]} {
    %c0 = arith.constant 0 : index
    %c0_0 = arith.constant 0 : index
    %c0_1 = arith.constant 0 : index
    %0 = vector.load %arg1[%c0, %c0_0, %c0_1] : memref<1x8x32xf32, #tpu.memory_space<vmem>>, vector<1x8x32xf32>
    %1 = vector.shape_cast %0 : vector<1x8x32xf32> to vector<8x32xf32>
    %c0_2 = arith.constant 0 : index
    %c0_3 = arith.constant 0 : index
    %2 = vector.load %arg2[%c0_2, %c0_3] : memref<1x32xf32, #tpu.memory_space<vmem>>, vector<1x32xf32>
    %c0_4 = arith.constant 0 : index
    %c0_5 = arith.constant 0 : index
    %3 = vector.load %arg3[%c0_4, %c0_5] : memref<1x32xf32, #tpu.memory_space<vmem>>, vector<1x32xf32>
    %cst = arith.constant dense<0.000000e+00> : vector<8xf32>
    %4 = vector.multi_reduction <add>, %1, %cst [1] : vector<8x32xf32> to vector<8xf32>
    %5 = vector.shape_cast %4 : vector<8xf32> to vector<8x1xf32>
    %cst_6 = arith.constant 3.200000e+01 : f32
    %6 = vector.broadcast %cst_6 : f32 to vector<8x1xf32>
    %7 = arith.divf %5, %6 : vector<8x1xf32>
    %8 = vector.broadcast %7 : vector<8x1xf32> to vector<8x32xf32>
    %9 = arith.subf %1, %8 : vector<8x32xf32>
    %10 = arith.mulf %9, %9 : vector<8x32xf32>
    %cst_7 = arith.constant dense<0.000000e+00> : vector<8xf32>
    %11 = vector.multi_reduction <add>, %10, %cst_7 [1] : vector<8x32xf32> to vector<8xf32>
    %12 = vector.shape_cast %11 : vector<8xf32> to vector<8x1xf32>
    %cst_8 = arith.constant 3.200000e+01 : f32
    %13 = vector.broadcast %cst_8 : f32 to vector<8x1xf32>
    %14 = arith.divf %12, %13 : vector<8x1xf32>
    %15 = vector.broadcast %7 : vector<8x1xf32> to vector<8x32xf32>
    %16 = arith.subf %1, %15 : vector<8x32xf32>
    %cst_9 = arith.constant 9.99999974E-6 : f32
    %17 = vector.broadcast %cst_9 : f32 to vector<8x1xf32>
    %18 = arith.addf %14, %17 : vector<8x1xf32>
    %19 = math.rsqrt %18 : vector<8x1xf32>
    %20 = vector.broadcast %19 : vector<8x1xf32> to vector<8x32xf32>
    %21 = arith.mulf %16, %20 : vector<8x32xf32>
    %22 = vector.broadcast %2 : vector<1x32xf32> to vector<8x32xf32>
    %23 = arith.mulf %21, %22 : vector<8x32xf32>
    %24 = vector.broadcast %3 : vector<1x32xf32> to vector<8x32xf32>
    %25 = arith.addf %23, %24 : vector<8x32xf32>
    %26 = arith.truncf %25 : vector<8x32xf32> to vector<8x32xbf16>
    %c0_10 = arith.constant 0 : index
    %c0_11 = arith.constant 0 : index
    %27 = vector.load %arg4[%c0_10, %c0_11] : memref<32x96xbf16, #tpu.memory_space<vmem>>, vector<32x96xbf16>
    %cst_12 = arith.constant dense<0.000000e+00> : vector<8x96xf32>
    %28 = tpu.matmul %26, %27, %cst_12 {dimension_numbers = #tpu.dot_dimension_numbers<[1], [0], [0], [1], [0, 0, 1, 1], [], []>} : vector<8x32xbf16>, vector<32x96xbf16>, vector<8x96xf32> -> vector<8x96xf32>
    %c0_13 = arith.constant 0 : index
    %c0_14 = arith.constant 0 : index
    %29 = vector.load %arg5[%c0_13, %c0_14] : memref<1x96xf32, #tpu.memory_space<vmem>>, vector<1x96xf32>
    %30 = vector.broadcast %29 : vector<1x96xf32> to vector<8x96xf32>
    %31 = arith.addf %28, %30 : vector<8x96xf32>
    %32 = arith.truncf %31 : vector<8x96xf32> to vector<8x96xbf16>
    %33 = tpu.iota {dimensions = array<i32: 0>} : vector<8x8xi32>
    %34 = tpu.iota {dimensions = array<i32: 1>} : vector<8x8xi32>
    %35 = arith.cmpi sle, %34, %33 : vector<8x8xi32>
    %36 = vector.extract_strided_slice %32 {offsets = [0, 0], sizes = [8, 8], strides = [1, 1]} : vector<8x96xbf16> to vector<8x8xbf16>
    %37 = vector.extract_strided_slice %32 {offsets = [0, 32], sizes = [8, 8], strides = [1, 1]} : vector<8x96xbf16> to vector<8x8xbf16>
    %38 = vector.extract_strided_slice %32 {offsets = [0, 64], sizes = [8, 8], strides = [1, 1]} : vector<8x96xbf16> to vector<8x8xbf16>
    %cst_15 = arith.constant dense<0.000000e+00> : vector<8x8xf32>
    %39 = tpu.matmul %36, %37, %cst_15 {dimension_numbers = #tpu.dot_dimension_numbers<[1], [1], [0], [0], [0, 0, 1, 0], [], []>} : vector<8x8xbf16>, vector<8x8xbf16>, vector<8x8xf32> -> vector<8x8xf32>
    %cst_16 = arith.constant 0xFF800000 : f32
    %40 = vector.broadcast %cst_16 : f32 to vector<8x8xf32>
    %41 = arith.select %35, %39, %40 : vector<8x8xi1>, vector<8x8xf32>
    %cst_17 = arith.constant dense<0xFF800000> : vector<8xf32>
    %42 = vector.multi_reduction <maximumf>, %41, %cst_17 [1] : vector<8x8xf32> to vector<8xf32>
    %43 = vector.shape_cast %42 : vector<8xf32> to vector<8x1xf32>
    %44 = vector.broadcast %43 : vector<8x1xf32> to vector<8x8xf32>
    %45 = arith.subf %41, %44 : vector<8x8xf32>
    %46 = math.exp %45 : vector<8x8xf32>
    %cst_18 = arith.constant dense<0.000000e+00> : vector<8xf32>
    %47 = vector.multi_reduction <add>, %46, %cst_18 [1] : vector<8x8xf32> to vector<8xf32>
    %48 = vector.shape_cast %47 : vector<8xf32> to vector<8x1xf32>
    %49 = arith.truncf %46 : vector<8x8xf32> to vector<8x8xbf16>
    %cst_19 = arith.constant dense<0.000000e+00> : vector<8x8xf32>
    %50 = tpu.matmul %49, %38, %cst_19 {dimension_numbers = #tpu.dot_dimension_numbers<[1], [0], [0], [1], [0, 0, 1, 1], [], []>} : vector<8x8xbf16>, vector<8x8xbf16>, vector<8x8xf32> -> vector<8x8xf32>
    %cst_20 = arith.constant 1.000000e+00 : f32
    %51 = vector.broadcast %cst_20 : f32 to vector<8x1xf32>
    %52 = arith.divf %51, %48 : vector<8x1xf32>
    %53 = vector.broadcast %52 : vector<8x1xf32> to vector<8x8xf32>
    %54 = arith.mulf %50, %53 : vector<8x8xf32>
    %55 = arith.truncf %54 : vector<8x8xf32> to vector<8x8xbf16>
    %c0_21 = arith.constant 0 : index
    %c0_22 = arith.constant 0 : index
    %c0_23 = arith.constant 0 : index
    %56 = vector.load %arg6[%c0_21, %c0_22, %c0_23] : memref<4x8x32xbf16, #tpu.memory_space<vmem>>, vector<1x8x32xbf16>
    %57 = vector.shape_cast %56 : vector<1x8x32xbf16> to vector<8x32xbf16>
    %cst_24 = arith.constant dense<0.000000e+00> : vector<8x32xf32>
    %58 = tpu.matmul %55, %57, %cst_24 {dimension_numbers = #tpu.dot_dimension_numbers<[1], [0], [0], [1], [0, 0, 1, 1], [], []>} : vector<8x8xbf16>, vector<8x32xbf16>, vector<8x32xf32> -> vector<8x32xf32>
    %59 = vector.extract_strided_slice %32 {offsets = [0, 8], sizes = [8, 8], strides = [1, 1]} : vector<8x96xbf16> to vector<8x8xbf16>
    %60 = vector.extract_strided_slice %32 {offsets = [0, 40], sizes = [8, 8], strides = [1, 1]} : vector<8x96xbf16> to vector<8x8xbf16>
    %61 = vector.extract_strided_slice %32 {offsets = [0, 72], sizes = [8, 8], strides = [1, 1]} : vector<8x96xbf16> to vector<8x8xbf16>
    %cst_25 = arith.constant dense<0.000000e+00> : vector<8x8xf32>
    %62 = tpu.matmul %59, %60, %cst_25 {dimension_numbers = #tpu.dot_dimension_numbers<[1], [1], [0], [0], [0, 0, 1, 0], [], []>} : vector<8x8xbf16>, vector<8x8xbf16>, vector<8x8xf32> -> vector<8x8xf32>
    %cst_26 = arith.constant 0xFF800000 : f32
    %63 = vector.broadcast %cst_26 : f32 to vector<8x8xf32>
    %64 = arith.select %35, %62, %63 : vector<8x8xi1>, vector<8x8xf32>
    %cst_27 = arith.constant dense<0xFF800000> : vector<8xf32>
    %65 = vector.multi_reduction <maximumf>, %64, %cst_27 [1] : vector<8x8xf32> to vector<8xf32>
    %66 = vector.shape_cast %65 : vector<8xf32> to vector<8x1xf32>
    %67 = vector.broadcast %66 : vector<8x1xf32> to vector<8x8xf32>
    %68 = arith.subf %64, %67 : vector<8x8xf32>
    %69 = math.exp %68 : vector<8x8xf32>
    %cst_28 = arith.constant dense<0.000000e+00> : vector<8xf32>
    %70 = vector.multi_reduction <add>, %69, %cst_28 [1] : vector<8x8xf32> to vector<8xf32>
    %71 = vector.shape_cast %70 : vector<8xf32> to vector<8x1xf32>
    %72 = arith.truncf %69 : vector<8x8xf32> to vector<8x8xbf16>
    %cst_29 = arith.constant dense<0.000000e+00> : vector<8x8xf32>
    %73 = tpu.matmul %72, %61, %cst_29 {dimension_numbers = #tpu.dot_dimension_numbers<[1], [0], [0], [1], [0, 0, 1, 1], [], []>} : vector<8x8xbf16>, vector<8x8xbf16>, vector<8x8xf32> -> vector<8x8xf32>
    %cst_30 = arith.constant 1.000000e+00 : f32
    %74 = vector.broadcast %cst_30 : f32 to vector<8x1xf32>
    %75 = arith.divf %74, %71 : vector<8x1xf32>
    %76 = vector.broadcast %75 : vector<8x1xf32> to vector<8x8xf32>
    %77 = arith.mulf %73, %76 : vector<8x8xf32>
    %78 = arith.truncf %77 : vector<8x8xf32> to vector<8x8xbf16>
    %c1 = arith.constant 1 : index
    %c0_31 = arith.constant 0 : index
    %c0_32 = arith.constant 0 : index
    %79 = vector.load %arg6[%c1, %c0_31, %c0_32] : memref<4x8x32xbf16, #tpu.memory_space<vmem>>, vector<1x8x32xbf16>
    %80 = vector.shape_cast %79 : vector<1x8x32xbf16> to vector<8x32xbf16>
    %cst_33 = arith.constant dense<0.000000e+00> : vector<8x32xf32>
    %81 = tpu.matmul %78, %80, %cst_33 {dimension_numbers = #tpu.dot_dimension_numbers<[1], [0], [0], [1], [0, 0, 1, 1], [], []>} : vector<8x8xbf16>, vector<8x32xbf16>, vector<8x32xf32> -> vector<8x32xf32>
    %82 = arith.addf %58, %81 : vector<8x32xf32>
    %83 = vector.extract_strided_slice %32 {offsets = [0, 16], sizes = [8, 8], strides = [1, 1]} : vector<8x96xbf16> to vector<8x8xbf16>
    %84 = vector.extract_strided_slice %32 {offsets = [0, 48], sizes = [8, 8], strides = [1, 1]} : vector<8x96xbf16> to vector<8x8xbf16>
    %85 = vector.extract_strided_slice %32 {offsets = [0, 80], sizes = [8, 8], strides = [1, 1]} : vector<8x96xbf16> to vector<8x8xbf16>
    %cst_34 = arith.constant dense<0.000000e+00> : vector<8x8xf32>
    %86 = tpu.matmul %83, %84, %cst_34 {dimension_numbers = #tpu.dot_dimension_numbers<[1], [1], [0], [0], [0, 0, 1, 0], [], []>} : vector<8x8xbf16>, vector<8x8xbf16>, vector<8x8xf32> -> vector<8x8xf32>
    %cst_35 = arith.constant 0xFF800000 : f32
    %87 = vector.broadcast %cst_35 : f32 to vector<8x8xf32>
    %88 = arith.select %35, %86, %87 : vector<8x8xi1>, vector<8x8xf32>
    %cst_36 = arith.constant dense<0xFF800000> : vector<8xf32>
    %89 = vector.multi_reduction <maximumf>, %88, %cst_36 [1] : vector<8x8xf32> to vector<8xf32>
    %90 = vector.shape_cast %89 : vector<8xf32> to vector<8x1xf32>
    %91 = vector.broadcast %90 : vector<8x1xf32> to vector<8x8xf32>
    %92 = arith.subf %88, %91 : vector<8x8xf32>
    %93 = math.exp %92 : vector<8x8xf32>
    %cst_37 = arith.constant dense<0.000000e+00> : vector<8xf32>
    %94 = vector.multi_reduction <add>, %93, %cst_37 [1] : vector<8x8xf32> to vector<8xf32>
    %95 = vector.shape_cast %94 : vector<8xf32> to vector<8x1xf32>
    %96 = arith.truncf %93 : vector<8x8xf32> to vector<8x8xbf16>
    %cst_38 = arith.constant dense<0.000000e+00> : vector<8x8xf32>
    %97 = tpu.matmul %96, %85, %cst_38 {dimension_numbers = #tpu.dot_dimension_numbers<[1], [0], [0], [1], [0, 0, 1, 1], [], []>} : vector<8x8xbf16>, vector<8x8xbf16>, vector<8x8xf32> -> vector<8x8xf32>
    %cst_39 = arith.constant 1.000000e+00 : f32
    %98 = vector.broadcast %cst_39 : f32 to vector<8x1xf32>
    %99 = arith.divf %98, %95 : vector<8x1xf32>
    %100 = vector.broadcast %99 : vector<8x1xf32> to vector<8x8xf32>
    %101 = arith.mulf %97, %100 : vector<8x8xf32>
    %102 = arith.truncf %101 : vector<8x8xf32> to vector<8x8xbf16>
    %c2 = arith.constant 2 : index
    %c0_40 = arith.constant 0 : index
    %c0_41 = arith.constant 0 : index
    %103 = vector.load %arg6[%c2, %c0_40, %c0_41] : memref<4x8x32xbf16, #tpu.memory_space<vmem>>, vector<1x8x32xbf16>
    %104 = vector.shape_cast %103 : vector<1x8x32xbf16> to vector<8x32xbf16>
    %cst_42 = arith.constant dense<0.000000e+00> : vector<8x32xf32>
    %105 = tpu.matmul %102, %104, %cst_42 {dimension_numbers = #tpu.dot_dimension_numbers<[1], [0], [0], [1], [0, 0, 1, 1], [], []>} : vector<8x8xbf16>, vector<8x32xbf16>, vector<8x32xf32> -> vector<8x32xf32>
    %106 = arith.addf %82, %105 : vector<8x32xf32>
    %107 = vector.extract_strided_slice %32 {offsets = [0, 24], sizes = [8, 8], strides = [1, 1]} : vector<8x96xbf16> to vector<8x8xbf16>
    %108 = vector.extract_strided_slice %32 {offsets = [0, 56], sizes = [8, 8], strides = [1, 1]} : vector<8x96xbf16> to vector<8x8xbf16>
    %109 = vector.extract_strided_slice %32 {offsets = [0, 88], sizes = [8, 8], strides = [1, 1]} : vector<8x96xbf16> to vector<8x8xbf16>
    %cst_43 = arith.constant dense<0.000000e+00> : vector<8x8xf32>
    %110 = tpu.matmul %107, %108, %cst_43 {dimension_numbers = #tpu.dot_dimension_numbers<[1], [1], [0], [0], [0, 0, 1, 0], [], []>} : vector<8x8xbf16>, vector<8x8xbf16>, vector<8x8xf32> -> vector<8x8xf32>
    %cst_44 = arith.constant 0xFF800000 : f32
    %111 = vector.broadcast %cst_44 : f32 to vector<8x8xf32>
    %112 = arith.select %35, %110, %111 : vector<8x8xi1>, vector<8x8xf32>
    %cst_45 = arith.constant dense<0xFF800000> : vector<8xf32>
    %113 = vector.multi_reduction <maximumf>, %112, %cst_45 [1] : vector<8x8xf32> to vector<8xf32>
    %114 = vector.shape_cast %113 : vector<8xf32> to vector<8x1xf32>
    %115 = vector.broadcast %114 : vector<8x1xf32> to vector<8x8xf32>
    %116 = arith.subf %112, %115 : vector<8x8xf32>
    %117 = math.exp %116 : vector<8x8xf32>
    %cst_46 = arith.constant dense<0.000000e+00> : vector<8xf32>
    %118 = vector.multi_reduction <add>, %117, %cst_46 [1] : vector<8x8xf32> to vector<8xf32>
    %119 = vector.shape_cast %118 : vector<8xf32> to vector<8x1xf32>
    %120 = arith.truncf %117 : vector<8x8xf32> to vector<8x8xbf16>
    %cst_47 = arith.constant dense<0.000000e+00> : vector<8x8xf32>
    %121 = tpu.matmul %120, %109, %cst_47 {dimension_numbers = #tpu.dot_dimension_numbers<[1], [0], [0], [1], [0, 0, 1, 1], [], []>} : vector<8x8xbf16>, vector<8x8xbf16>, vector<8x8xf32> -> vector<8x8xf32>
    %cst_48 = arith.constant 1.000000e+00 : f32
    %122 = vector.broadcast %cst_48 : f32 to vector<8x1xf32>
    %123 = arith.divf %122, %119 : vector<8x1xf32>
    %124 = vector.broadcast %123 : vector<8x1xf32> to vector<8x8xf32>
    %125 = arith.mulf %121, %124 : vector<8x8xf32>
    %126 = arith.truncf %125 : vector<8x8xf32> to vector<8x8xbf16>
    %c3 = arith.constant 3 : index
    %c0_49 = arith.constant 0 : index
    %c0_50 = arith.constant 0 : index
    %127 = vector.load %arg6[%c3, %c0_49, %c0_50] : memref<4x8x32xbf16, #tpu.memory_space<vmem>>, vector<1x8x32xbf16>
    %128 = vector.shape_cast %127 : vector<1x8x32xbf16> to vector<8x32xbf16>
    %cst_51 = arith.constant dense<0.000000e+00> : vector<8x32xf32>
    %129 = tpu.matmul %126, %128, %cst_51 {dimension_numbers = #tpu.dot_dimension_numbers<[1], [0], [0], [1], [0, 0, 1, 1], [], []>} : vector<8x8xbf16>, vector<8x32xbf16>, vector<8x32xf32> -> vector<8x32xf32>
    %130 = arith.addf %106, %129 : vector<8x32xf32>
    %c0_52 = arith.constant 0 : index
    %c0_53 = arith.constant 0 : index
    %131 = vector.load %arg7[%c0_52, %c0_53] : memref<1x32xf32, #tpu.memory_space<vmem>>, vector<1x32xf32>
    %132 = vector.broadcast %131 : vector<1x32xf32> to vector<8x32xf32>
    %133 = arith.addf %130, %132 : vector<8x32xf32>
    %134 = arith.addf %133, %1 : vector<8x32xf32>
    %c0_54 = arith.constant 0 : index
    %c0_55 = arith.constant 0 : index
    %135 = vector.load %arg8[%c0_54, %c0_55] : memref<1x32xf32, #tpu.memory_space<vmem>>, vector<1x32xf32>
    %c0_56 = arith.constant 0 : index
    %c0_57 = arith.constant 0 : index
    %136 = vector.load %arg9[%c0_56, %c0_57] : memref<1x32xf32, #tpu.memory_space<vmem>>, vector<1x32xf32>
    %cst_58 = arith.constant dense<0.000000e+00> : vector<8xf32>
    %137 = vector.multi_reduction <add>, %134, %cst_58 [1] : vector<8x32xf32> to vector<8xf32>
    %138 = vector.shape_cast %137 : vector<8xf32> to vector<8x1xf32>
    %cst_59 = arith.constant 3.200000e+01 : f32
    %139 = vector.broadcast %cst_59 : f32 to vector<8x1xf32>
    %140 = arith.divf %138, %139 : vector<8x1xf32>
    %141 = vector.broadcast %140 : vector<8x1xf32> to vector<8x32xf32>
    %142 = arith.subf %134, %141 : vector<8x32xf32>
    %143 = arith.mulf %142, %142 : vector<8x32xf32>
    %cst_60 = arith.constant dense<0.000000e+00> : vector<8xf32>
    %144 = vector.multi_reduction <add>, %143, %cst_60 [1] : vector<8x32xf32> to vector<8xf32>
    %145 = vector.shape_cast %144 : vector<8xf32> to vector<8x1xf32>
    %cst_61 = arith.constant 3.200000e+01 : f32
    %146 = vector.broadcast %cst_61 : f32 to vector<8x1xf32>
    %147 = arith.divf %145, %146 : vector<8x1xf32>
    %148 = vector.broadcast %140 : vector<8x1xf32> to vector<8x32xf32>
    %149 = arith.subf %134, %148 : vector<8x32xf32>
    %cst_62 = arith.constant 9.99999974E-6 : f32
    %150 = vector.broadcast %cst_62 : f32 to vector<8x1xf32>
    %151 = arith.addf %147, %150 : vector<8x1xf32>
    %152 = math.rsqrt %151 : vector<8x1xf32>
    %153 = vector.broadcast %152 : vector<8x1xf32> to vector<8x32xf32>
    %154 = arith.mulf %149, %153 : vector<8x32xf32>
    %155 = vector.broadcast %135 : vector<1x32xf32> to vector<8x32xf32>
    %156 = arith.mulf %154, %155 : vector<8x32xf32>
    %157 = vector.broadcast %136 : vector<1x32xf32> to vector<8x32xf32>
    %158 = arith.addf %156, %157 : vector<8x32xf32>
    %159 = arith.truncf %158 : vector<8x32xf32> to vector<8x32xbf16>
    %c0_63 = arith.constant 0 : index
    %c0_64 = arith.constant 0 : index
    %160 = vector.load %arg10[%c0_63, %c0_64] : memref<32x128xbf16, #tpu.memory_space<vmem>>, vector<32x128xbf16>
    %cst_65 = arith.constant dense<0.000000e+00> : vector<8x128xf32>
    %161 = tpu.matmul %159, %160, %cst_65 {dimension_numbers = #tpu.dot_dimension_numbers<[1], [0], [0], [1], [0, 0, 1, 1], [], []>} : vector<8x32xbf16>, vector<32x128xbf16>, vector<8x128xf32> -> vector<8x128xf32>
    %c0_66 = arith.constant 0 : index
    %c0_67 = arith.constant 0 : index
    %162 = vector.load %arg11[%c0_66, %c0_67] : memref<1x128xf32, #tpu.memory_space<vmem>>, vector<1x128xf32>
    %163 = vector.broadcast %162 : vector<1x128xf32> to vector<8x128xf32>
    %164 = arith.addf %161, %163 : vector<8x128xf32>
    %cst_68 = arith.constant -1.702000e+00 : f32
    %165 = vector.broadcast %cst_68 : f32 to vector<8x128xf32>
    %166 = arith.mulf %165, %164 : vector<8x128xf32>
    %167 = math.exp %166 : vector<8x128xf32>
    %cst_69 = arith.constant 1.000000e+00 : f32
    %168 = vector.broadcast %cst_69 : f32 to vector<8x128xf32>
    %169 = arith.addf %168, %167 : vector<8x128xf32>
    %170 = tpu.reciprocal %169 {approx = true} : vector<8x128xf32> -> vector<8x128xf32>
    %171 = arith.mulf %164, %170 : vector<8x128xf32>
    %172 = arith.truncf %171 : vector<8x128xf32> to vector<8x128xbf16>
    %c0_70 = arith.constant 0 : index
    %c0_71 = arith.constant 0 : index
    %173 = vector.load %arg12[%c0_70, %c0_71] : memref<128x32xbf16, #tpu.memory_space<vmem>>, vector<128x32xbf16>
    %cst_72 = arith.constant dense<0.000000e+00> : vector<8x32xf32>
    %174 = tpu.matmul %172, %173, %cst_72 {dimension_numbers = #tpu.dot_dimension_numbers<[1], [0], [0], [1], [0, 0, 1, 1], [], []>} : vector<8x128xbf16>, vector<128x32xbf16>, vector<8x32xf32> -> vector<8x32xf32>
    %c0_73 = arith.constant 0 : index
    %c0_74 = arith.constant 0 : index
    %175 = vector.load %arg13[%c0_73, %c0_74] : memref<1x32xf32, #tpu.memory_space<vmem>>, vector<1x32xf32>
    %176 = vector.broadcast %175 : vector<1x32xf32> to vector<8x32xf32>
    %177 = arith.addf %174, %176 : vector<8x32xf32>
    %178 = arith.addf %177, %134 : vector<8x32xf32>
    %c0_75 = arith.constant 0 : index
    %c0_76 = arith.constant 0 : index
    %c0_77 = arith.constant 0 : index
    %179 = vector.load %arg14[%c0_75, %c0_76, %c0_77] : memref<1x8x32xf32, #tpu.memory_space<vmem>>, vector<1x8x32xf32>
    %180 = vector.shape_cast %179 : vector<1x8x32xf32> to vector<8x32xf32>
    %181 = vector.shape_cast %178 : vector<8x32xf32> to vector<1x8x32xf32>
    tpu.vector_store %arg14[%c0_75, %c0_76, %c0_77], %181 {strides = array<i32>} : memref<1x8x32xf32, #tpu.memory_space<vmem>>, vector<1x8x32xf32>,
    return
  }
  func.func @transform_0(%arg0: i32) -> (i32, i32, i32) {
    %c0_i32 = arith.constant 0 : i32
    %c0_i32_0 = arith.constant 0 : i32
    %c0_i32_1 = arith.constant 0 : i32
    return %arg0, %c0_i32, %c0_i32_0 : i32, i32, i32
  }
  func.func @transform_1(%arg0: i32) -> (i32, i32) {
    %c0_i32 = arith.constant 0 : i32
    %c0_i32_0 = arith.constant 0 : i32
    %c0_i32_1 = arith.constant 0 : i32
    return %c0_i32, %c0_i32_0 : i32, i32
  }
  func.func @transform_2(%arg0: i32) -> (i32, i32) {
    %c0_i32 = arith.constant 0 : i32
    %c0_i32_0 = arith.constant 0 : i32
    %c0_i32_1 = arith.constant 0 : i32
    return %c0_i32, %c0_i32_0 : i32, i32
  }
  func.func @transform_3(%arg0: i32) -> (i32, i32) {
    %c0_i32 = arith.constant 0 : i32
    %c0_i32_0 = arith.constant 0 : i32
    %c0_i32_1 = arith.constant 0 : i32
    return %c0_i32, %c0_i32_0 : i32, i32
  }
  func.func @transform_4(%arg0: i32) -> (i32, i32) {
    %c0_i32 = arith.constant 0 : i32
    %c0_i32_0 = arith.constant 0 : i32
    %c0_i32_1 = arith.constant 0 : i32
    return %c0_i32, %c0_i32_0 : i32, i32
  }
  func.func @transform_5(%arg0: i32) -> (i32, i32, i32) {
    %c0_i32 = arith.constant 0 : i32
    %c0_i32_0 = arith.constant 0 : i32
    %c0_i32_1 = arith.constant 0 : i32
    %c0_i32_2 = arith.constant 0 : i32
    return %c0_i32, %c0_i32_0, %c0_i32_1 : i32, i32, i32
  }
  func.func @transform_6(%arg0: i32) -> (i32, i32) {
    %c0_i32 = arith.constant 0 : i32
    %c0_i32_0 = arith.constant 0 : i32
    %c0_i32_1 = arith.constant 0 : i32
    return %c0_i32, %c0_i32_0 : i32, i32
  }
  func.func @transform_7(%arg0: i32) -> (i32, i32) {
    %c0_i32 = arith.constant 0 : i32
    %c0_i32_0 = arith.constant 0 : i32
    %c0_i32_1 = arith.constant 0 : i32
    return %c0_i32, %c0_i32_0 : i32, i32
  }
  func.func @transform_8(%arg0: i32) -> (i32, i32) {
    %c0_i32 = arith.constant 0 : i32
    %c0_i32_0 = arith.constant 0 : i32
    %c0_i32_1 = arith.constant 0 : i32
    return %c0_i32, %c0_i32_0 : i32, i32
  }
  func.func @transform_9(%arg0: i32) -> (i32, i32) {
    %c0_i32 = arith.constant 0 : i32
    %c0_i32_0 = arith.constant 0 : i32
    %c0_i32_1 = arith.constant 0 : i32
    return %c0_i32, %c0_i32_0 : i32, i32
  }
  func.func @transform_10(%arg0: i32) -> (i32, i32) {
    %c0_i32 = arith.constant 0 : i32
    %c0_i32_0 = arith.constant 0 : i32
    %c0_i32_1 = arith.constant 0 : i32
    return %c0_i32, %c0_i32_0 : i32, i32
  }
  func.func @transform_11(%arg0: i32) -> (i32, i32) {
    %c0_i32 = arith.constant 0 : i32
    %c0_i32_0 = arith.constant 0 : i32
    %c0_i32_1 = arith.constant 0 : i32
    return %c0_i32, %c0_i32_0 : i32, i32
  }
  func.func @transform_12(%arg0: i32) -> (i32, i32) {
    %c0_i32 = arith.constant 0 : i32
    %c0_i32_0 = arith.constant 0 : i32
    %c0_i32_1 = arith.constant 0 : i32
    return %c0_i32, %c0_i32_0 : i32, i32
  }
  func.func @transform_13(%arg0: i32) -> (i32, i32, i32) {
    %c0_i32 = arith.constant 0 : i32
    %c0_i32_0 = arith.constant 0 : i32
    %c0_i32_1 = arith.constant 0 : i32
    return %arg0, %c0_i32, %c0_i32_0 : i32, i32, i32
  }
}

</mosaic_0001>

<llo_original>
// kernel: tpu_custom_call.1
$region0: #{tpu_custom_call.1}
  #allocation0 [shape = 'u32[]', space=smem, size = 0x4, offset = 0x4, fixed_abs, tag = 'smem constant byte address 0x4 - core index']
  #allocation1 [shape = 'u32[72,128]{1,0:T(1,128)}', space=vmem, size = 0x9000, scoped, tag = 'internal scratch']
  %s0 = inlined_call_operand.vmem [shape: f32[2,8,32], index: 0, kind: input, shape index: {}]
  %s1 = inlined_call_operand.vmem [shape: f32[1,32], index: 1, kind: input, shape index: {}]
  %s2 = inlined_call_operand.vmem [shape: f32[1,32], index: 2, kind: input, shape index: {}]
  %s3 = inlined_call_operand.vmem [shape: bf16[32,96], index: 3, kind: input, shape index: {}]
  %s4 = inlined_call_operand.vmem [shape: f32[1,96], index: 4, kind: input, shape index: {}]
  %s5 = inlined_call_operand.vmem [shape: bf16[4,8,32], index: 5, kind: input, shape index: {}]
  %s6 = inlined_call_operand.vmem [shape: f32[1,32], index: 6, kind: input, shape index: {}]
  %s7 = inlined_call_operand.vmem [shape: f32[1,32], index: 7, kind: input, shape index: {}]
  %s8 = inlined_call_operand.vmem [shape: f32[1,32], index: 8, kind: input, shape index: {}]
  %s9 = inlined_call_operand.vmem [shape: bf16[32,128], index: 9, kind: input, shape index: {}]
  %s10 = inlined_call_operand.vmem [shape: f32[1,128], index: 10, kind: input, shape index: {}]
  %s11 = inlined_call_operand.vmem [shape: bf16[128,32], index: 11, kind: input, shape index: {}]
  %s12 = inlined_call_operand.vmem [shape: f32[1,32], index: 12, kind: input, shape index: {}]
  %s13 = inlined_call_operand.hbm [shape: f32[2,8,32], index: 13, kind: output, shape index: {}]
  %s14 = sld [smem:[#allocation0]]
  $region85: #{tpu_custom_call.1} parent=0
    _
  %s16 = ssub.s32 1, %s14
  %s17 = scalar_select 0, %s16, %s14
  $region1: #{tpu_custom_call.1} parent=0
    #allocation2 [shape = 'u8[8192]{0}', space=vmem, size = 0x2000, scoped, tag = 'output window, operand 0']
    #allocation3 [shape = 's32[2]{0}', space=sflag, size = 0x8, scoped, tag = 'scoped memory for tpu_custom_call.1']
    %18 = vsyncpa [#allocation3], 0
    %s19 = scalar_lea.sflag [#allocation3], 1
    %20 = vsyncpa %s19, 0
    loop: start=0, step=1, limit=4
    $region2: #{tpu_custom_call.1} parent=1 // loop_pre_header
      _
    $region3: #{tpu_custom_call.1} parent=1 // loop_header
      %s22 = sphi 0, %s26
      %p23 = scmp.ge.s32.totalorder %s22, 4
      %s32 = sphi 0, %s34
      %s35 = sphi 0, %s32
      %s36 = sphi 0, %s35
      %s52 = sphi 0, %s36
      %s56 = sphi 0, %s56
      %s58 = sphi 0, %s56
      %s59 = sphi 0, %s58
      %s73 = sphi 0, %s59
      %s77 = sphi 0, %s77
      %s79 = sphi 0, %s77
      %s80 = sphi 0, %s79
      %s94 = sphi 0, %s80
      %s98 = sphi 0, %s98
      %s100 = sphi 0, %s98
      %s101 = sphi 0, %s100
      %s115 = sphi 0, %s101
      %s119 = sphi 0, %s119
      %s121 = sphi 0, %s119
      %s122 = sphi 0, %s121
      %s136 = sphi 0, %s122
      %s140 = sphi 0, %s140
      %s142 = sphi 0, %s140
      %s143 = sphi 0, %s142
      %s157 = sphi 0, %s143
      %s161 = sphi 0, %s161
      %s163 = sphi 0, %s161
      %s164 = sphi 0, %s163
      %s178 = sphi 0, %s164
      %s182 = sphi 0, %s182
      %s184 = sphi 0, %s182
      %s185 = sphi 0, %s184
      %s199 = sphi 0, %s185
      %s203 = sphi 0, %s203
      %s205 = sphi 0, %s203
      %s206 = sphi 0, %s205
      %s220 = sphi 0, %s206
      %s224 = sphi 0, %s224
      %s226 = sphi 0, %s224
      %s227 = sphi 0, %s226
      %s241 = sphi 0, %s227
      %s245 = sphi 0, %s245
      %s247 = sphi 0, %s245
      %s248 = sphi 0, %s247
      %s262 = sphi 0, %s248
      %s266 = sphi 0, %s266
      %s268 = sphi 0, %s266
      %s269 = sphi 0, %s268
      %s283 = sphi 0, %s269
      %s287 = sphi 0, %s287
      %s289 = sphi 0, %s287
      %s290 = sphi 0, %s289
      %s304 = sphi 0, %s290
      %s310 = sphi 0, %s312
      %s313 = sphi 0, %s310
      %s314 = sphi 0, %s313
      %s330 = sphi 0, %s314
    $region4: #{tpu_custom_call.1} parent=1 // loop_header_branch
      %25 = sbr.rel (%p23) target = $region8
    $region5: #{tpu_custom_call.1} parent=1 // loop_body
      %s27 = ssub.s32 %s22, 1
      %s28 = ssub.s32 %s22, 2
      %s29 = sadd.s32 %s22, 1
      %s30 = ssub.s32 %s22, %s29
      %p31 = scmp.eq.s32.totalorder %s30, 0
      %s33 = sadd.s32 %s32, 1
      %s34 = scalar_select %p31, %s32, %s33
      %p37 = pneg %p31
      %p38 = scmp.eq.s32.totalorder %s22, 1
      %p39 = por %p37, %p38
      %p40 = scmp.ne.s32.totalorder %s32, %s35
      %p41 = scmp.eq.s32.totalorder %s22, 0
      %p42 = por %p40, %p41
      %p43 = scmp.ne.s32.totalorder %s32, %s35
      %p44 = scmp.eq.s32.totalorder %s27, 1
      %p45 = por %p43, %p44
      %p46 = scmp.ne.s32.totalorder %s35, %s36
      %p47 = scmp.eq.s32.totalorder %s27, 0
      %p48 = por %p46, %p47
      %p49 = scmp.ne.s32.totalorder %s35, %s36
      %p50 = scmp.eq.s32.totalorder %s28, 1
      %p51 = por %p49, %p50
      %p53 = scmp.ne.s32.totalorder %s36, %s52
      %p54 = scmp.eq.s32.totalorder %s28, 0
      %p55 = por %p53, %p54
      %s57 = sadd.s32 %s56, 1
      %p60 = scmp.eq.s32.totalorder %s22, 1
      %p61 = scmp.ne.s32.totalorder %s56, %s58
      %p62 = scmp.eq.s32.totalorder %s22, 0
      %p63 = por %p61, %p62
      %p64 = scmp.ne.s32.totalorder %s56, %s58
      %p65 = scmp.eq.s32.totalorder %s27, 1
      %p66 = por %p64, %p65
      %p67 = scmp.ne.s32.totalorder %s58, %s59
      %p68 = scmp.eq.s32.totalorder %s27, 0
      %p69 = por %p67, %p68
      %p70 = scmp.ne.s32.totalorder %s58, %s59
      %p71 = scmp.eq.s32.totalorder %s28, 1
      %p72 = por %p70, %p71
      %p74 = scmp.ne.s32.totalorder %s59, %s73
      %p75 = scmp.eq.s32.totalorder %s28, 0
      %p76 = por %p74, %p75
      %s78 = sadd.s32 %s77, 1
      %p81 = scmp.eq.s32.totalorder %s22, 1
      %p82 = scmp.ne.s32.totalorder %s77, %s79
      %p83 = scmp.eq.s32.totalorder %s22, 0
      %p84 = por %p82, %p83
      %p85 = scmp.ne.s32.totalorder %s77, %s79
      %p86 = scmp.eq.s32.totalorder %s27, 1
      %p87 = por %p85, %p86
      %p88 = scmp.ne.s32.totalorder %s79, %s80
      %p89 = scmp.eq.s32.totalorder %s27, 0
      %p90 = por %p88, %p89
      %p91 = scmp.ne.s32.totalorder %s79, %s80
      %p92 = scmp.eq.s32.totalorder %s28, 1
      %p93 = por %p91, %p92
      %p95 = scmp.ne.s32.totalorder %s80, %s94
      %p96 = scmp.eq.s32.totalorder %s28, 0
      %p97 = por %p95, %p96
      %s99 = sadd.s32 %s98, 1
      %p102 = scmp.eq.s32.totalorder %s22, 1
      %p103 = scmp.ne.s32.totalorder %s98, %s100
      %p104 = scmp.eq.s32.totalorder %s22, 0
      %p105 = por %p103, %p104
      %p106 = scmp.ne.s32.totalorder %s98, %s100
      %p107 = scmp.eq.s32.totalorder %s27, 1
      %p108 = por %p106, %p107
      %p109 = scmp.ne.s32.totalorder %s100, %s101
      %p110 = scmp.eq.s32.totalorder %s27, 0
      %p111 = por %p109, %p110
      %p112 = scmp.ne.s32.totalorder %s100, %s101
      %p113 = scmp.eq.s32.totalorder %s28, 1
      %p114 = por %p112, %p113
      %p116 = scmp.ne.s32.totalorder %s101, %s115
      %p117 = scmp.eq.s32.totalorder %s28, 0
      %p118 = por %p116, %p117
      %s120 = sadd.s32 %s119, 1
      %p123 = scmp.eq.s32.totalorder %s22, 1
      %p124 = scmp.ne.s32.totalorder %s119, %s121
      %p125 = scmp.eq.s32.totalorder %s22, 0
      %p126 = por %p124, %p125
      %p127 = scmp.ne.s32.totalorder %s119, %s121
      %p128 = scmp.eq.s32.totalorder %s27, 1
      %p129 = por %p127, %p128
      %p130 = scmp.ne.s32.totalorder %s121, %s122
      %p131 = scmp.eq.s32.totalorder %s27, 0
      %p132 = por %p130, %p131
      %p133 = scmp.ne.s32.totalorder %s121, %s122
      %p134 = scmp.eq.s32.totalorder %s28, 1
      %p135 = por %p133, %p134
      %p137 = scmp.ne.s32.totalorder %s122, %s136
      %p138 = scmp.eq.s32.totalorder %s28, 0
      %p139 = por %p137, %p138
      %s141 = sadd.s32 %s140, 1
      %p144 = scmp.eq.s32.totalorder %s22, 1
      %p145 = scmp.ne.s32.totalorder %s140, %s142
      %p146 = scmp.eq.s32.totalorder %s22, 0
      %p147 = por %p145, %p146
      %p148 = scmp.ne.s32.totalorder %s140, %s142
      %p149 = scmp.eq.s32.totalorder %s27, 1
      %p150 = por %p148, %p149
      %p151 = scmp.ne.s32.totalorder %s142, %s143
      %p152 = scmp.eq.s32.totalorder %s27, 0
      %p153 = por %p151, %p152
      %p154 = scmp.ne.s32.totalorder %s142, %s143
      %p155 = scmp.eq.s32.totalorder %s28, 1
      %p156 = por %p154, %p155
      %p158 = scmp.ne.s32.totalorder %s143, %s157
      %p159 = scmp.eq.s32.totalorder %s28, 0
      %p160 = por %p158, %p159
      %s162 = sadd.s32 %s161, 1
      %p165 = scmp.eq.s32.totalorder %s22, 1
      %p166 = scmp.ne.s32.totalorder %s161, %s163
      %p167 = scmp.eq.s32.totalorder %s22, 0
      %p168 = por %p166, %p167
      %p169 = scmp.ne.s32.totalorder %s161, %s163
      %p170 = scmp.eq.s32.totalorder %s27, 1
      %p171 = por %p169, %p170
      %p172 = scmp.ne.s32.totalorder %s163, %s164
      %p173 = scmp.eq.s32.totalorder %s27, 0
      %p174 = por %p172, %p173
      %p175 = scmp.ne.s32.totalorder %s163, %s164
      %p176 = scmp.eq.s32.totalorder %s28, 1
      %p177 = por %p175, %p176
      %p179 = scmp.ne.s32.totalorder %s164, %s178
      %p180 = scmp.eq.s32.totalorder %s28, 0
      %p181 = por %p179, %p180
      %s183 = sadd.s32 %s182, 1
      %p186 = scmp.eq.s32.totalorder %s22, 1
      %p187 = scmp.ne.s32.totalorder %s182, %s184
      %p188 = scmp.eq.s32.totalorder %s22, 0
      %p189 = por %p187, %p188
      %p190 = scmp.ne.s32.totalorder %s182, %s184
      %p191 = scmp.eq.s32.totalorder %s27, 1
      %p192 = por %p190, %p191
      %p193 = scmp.ne.s32.totalorder %s184, %s185
      %p194 = scmp.eq.s32.totalorder %s27, 0
      %p195 = por %p193, %p194
      %p196 = scmp.ne.s32.totalorder %s184, %s185
      %p197 = scmp.eq.s32.totalorder %s28, 1
      %p198 = por %p196, %p197
      %p200 = scmp.ne.s32.totalorder %s185, %s199
      %p201 = scmp.eq.s32.totalorder %s28, 0
      %p202 = por %p200, %p201
      %s204 = sadd.s32 %s203, 1
      %p207 = scmp.eq.s32.totalorder %s22, 1
      %p208 = scmp.ne.s32.totalorder %s203, %s205
      %p209 = scmp.eq.s32.totalorder %s22, 0
      %p210 = por %p208, %p209
      %p211 = scmp.ne.s32.totalorder %s203, %s205
      %p212 = scmp.eq.s32.totalorder %s27, 1
      %p213 = por %p211, %p212
      %p214 = scmp.ne.s32.totalorder %s205, %s206
      %p215 = scmp.eq.s32.totalorder %s27, 0
      %p216 = por %p214, %p215
      %p217 = scmp.ne.s32.totalorder %s205, %s206
      %p218 = scmp.eq.s32.totalorder %s28, 1
      %p219 = por %p217, %p218
      %p221 = scmp.ne.s32.totalorder %s206, %s220
      %p222 = scmp.eq.s32.totalorder %s28, 0
      %p223 = por %p221, %p222
      %s225 = sadd.s32 %s224, 1
      %p228 = scmp.eq.s32.totalorder %s22, 1
      %p229 = scmp.ne.s32.totalorder %s224, %s226
      %p230 = scmp.eq.s32.totalorder %s22, 0
      %p231 = por %p229, %p230
      %p232 = scmp.ne.s32.totalorder %s224, %s226
      %p233 = scmp.eq.s32.totalorder %s27, 1
      %p234 = por %p232, %p233
      %p235 = scmp.ne.s32.totalorder %s226, %s227
      %p236 = scmp.eq.s32.totalorder %s27, 0
      %p237 = por %p235, %p236
      %p238 = scmp.ne.s32.totalorder %s226, %s227
      %p239 = scmp.eq.s32.totalorder %s28, 1
      %p240 = por %p238, %p239
      %p242 = scmp.ne.s32.totalorder %s227, %s241
      %p243 = scmp.eq.s32.totalorder %s28, 0
      %p244 = por %p242, %p243
      %s246 = sadd.s32 %s245, 1
      %p249 = scmp.eq.s32.totalorder %s22, 1
      %p250 = scmp.ne.s32.totalorder %s245, %s247
      %p251 = scmp.eq.s32.totalorder %s22, 0
      %p252 = por %p250, %p251
      %p253 = scmp.ne.s32.totalorder %s245, %s247
      %p254 = scmp.eq.s32.totalorder %s27, 1
      %p255 = por %p253, %p254
      %p256 = scmp.ne.s32.totalorder %s247, %s248
      %p257 = scmp.eq.s32.totalorder %s27, 0
      %p258 = por %p256, %p257
      %p259 = scmp.ne.s32.totalorder %s247, %s248
      %p260 = scmp.eq.s32.totalorder %s28, 1
      %p261 = por %p259, %p260
      %p263 = scmp.ne.s32.totalorder %s248, %s262
      %p264 = scmp.eq.s32.totalorder %s28, 0
      %p265 = por %p263, %p264
      %s267 = sadd.s32 %s266, 1
      %p270 = scmp.eq.s32.totalorder %s22, 1
      %p271 = scmp.ne.s32.totalorder %s266, %s268
      %p272 = scmp.eq.s32.totalorder %s22, 0
      %p273 = por %p271, %p272
      %p274 = scmp.ne.s32.totalorder %s266, %s268
      %p275 = scmp.eq.s32.totalorder %s27, 1
      %p276 = por %p274, %p275
      %p277 = scmp.ne.s32.totalorder %s268, %s269
      %p278 = scmp.eq.s32.totalorder %s27, 0
      %p279 = por %p277, %p278
      %p280 = scmp.ne.s32.totalorder %s268, %s269
      %p281 = scmp.eq.s32.totalorder %s28, 1
      %p282 = por %p280, %p281
      %p284 = scmp.ne.s32.totalorder %s269, %s283
      %p285 = scmp.eq.s32.totalorder %s28, 0
      %p286 = por %p284, %p285
      %s288 = sadd.s32 %s287, 1
      %p291 = scmp.eq.s32.totalorder %s22, 1
      %p292 = scmp.ne.s32.totalorder %s287, %s289
      %p293 = scmp.eq.s32.totalorder %s22, 0
      %p294 = por %p292, %p293
      %p295 = scmp.ne.s32.totalorder %s287, %s289
      %p296 = scmp.eq.s32.totalorder %s27, 1
      %p297 = por %p295, %p296
      %p298 = scmp.ne.s32.totalorder %s289, %s290
      %p299 = scmp.eq.s32.totalorder %s27, 0
      %p300 = por %p298, %p299
      %p301 = scmp.ne.s32.totalorder %s289, %s290
      %p302 = scmp.eq.s32.totalorder %s28, 1
      %p303 = por %p301, %p302
      %p305 = scmp.ne.s32.totalorder %s290, %s304
      %p306 = scmp.eq.s32.totalorder %s28, 0
      %p307 = por %p305, %p306
      %s308 = ssub.s32 %s22, %s29
      %p309 = scmp.eq.s32.totalorder %s308, 0
      %s311 = sadd.s32 %s310, 1
      %s312 = scalar_select %p309, %s310, %s311
      %p315 = pneg %p309
      %p316 = scmp.eq.s32.totalorder %s22, 1
      %p317 = por %p315, %p316
      %p318 = scmp.ne.s32.totalorder %s310, %s313
      %p319 = scmp.eq.s32.totalorder %s22, 0
      %p320 = por %p318, %p319
      %p321 = scmp.ne.s32.totalorder %s310, %s313
      %p322 = scmp.eq.s32.totalorder %s27, 1
      %p323 = por %p321, %p322
      %p324 = scmp.ne.s32.totalorder %s313, %s314
      %p325 = scmp.eq.s32.totalorder %s27, 0
      %p326 = por %p324, %p325
      %p327 = scmp.ne.s32.totalorder %s313, %s314
      %p328 = scmp.eq.s32.totalorder %s28, 1
      %p329 = por %p327, %p328
      %p331 = scmp.ne.s32.totalorder %s314, %s330
      %p332 = scmp.eq.s32.totalorder %s28, 0
      %p333 = por %p331, %p332
      %p334 = scmp.le.s32.totalorder 1, %s22
      %p335 = scmp.lt.s32.totalorder %s22, 3
      %p336 = pnand %p334, %p335
      %p337 = pneg %p336
      // Predicated region
      $region9: #{tpu_custom_call.1} parent=5 // pred_check
        _
      $region10: #{tpu_custom_call.1} parent=5 // pred_check_branch
        %339 = sbr.rel (%p336) target = $region12
      $region11: #{tpu_custom_call.1} parent=5 // pred_region
        %s340 = ssub.s32 %s22, 1
        // Predicated region
        $region13: #{tpu_custom_call.1} parent=11 // pred_check
          %p341 = pneg %p69
        $region14: #{tpu_custom_call.1} parent=11 // pred_check_branch
          %343 = sbr.rel (%p341) target = $region16
        $region15: #{tpu_custom_call.1} parent=11 // pred_region
          _
        $region16: #{tpu_custom_call.1} parent=11 // pred_fallthru
          _
        // Predicated region
        $region17: #{tpu_custom_call.1} parent=11 // pred_check
          %p344 = pneg %p90
        $region18: #{tpu_custom_call.1} parent=11 // pred_check_branch
          %346 = sbr.rel (%p344) target = $region20
        $region19: #{tpu_custom_call.1} parent=11 // pred_region
          _
        $region20: #{tpu_custom_call.1} parent=11 // pred_fallthru
          _
        // Predicated region
        $region21: #{tpu_custom_call.1} parent=11 // pred_check
          %p347 = pneg %p111
        $region22: #{tpu_custom_call.1} parent=11 // pred_check_branch
          %349 = sbr.rel (%p347) target = $region24
        $region23: #{tpu_custom_call.1} parent=11 // pred_region
          _
        $region24: #{tpu_custom_call.1} parent=11 // pred_fallthru
          _
        // Predicated region
        $region25: #{tpu_custom_call.1} parent=11 // pred_check
          %p350 = pneg %p132
        $region26: #{tpu_custom_call.1} parent=11 // pred_check_branch
          %352 = sbr.rel (%p350) target = $region28
        $region27: #{tpu_custom_call.1} parent=11 // pred_region
          _
        $region28: #{tpu_custom_call.1} parent=11 // pred_fallthru
          _
        // Predicated region
        $region29: #{tpu_custom_call.1} parent=11 // pred_check
          %p353 = pneg %p153
        $region30: #{tpu_custom_call.1} parent=11 // pred_check_branch
          %355 = sbr.rel (%p353) target = $region32
        $region31: #{tpu_custom_call.1} parent=11 // pred_region
          _
        $region32: #{tpu_custom_call.1} parent=11 // pred_fallthru
          _
        // Predicated region
        $region33: #{tpu_custom_call.1} parent=11 // pred_check
          %p356 = pneg %p174
        $region34: #{tpu_custom_call.1} parent=11 // pred_check_branch
          %358 = sbr.rel (%p356) target = $region36
        $region35: #{tpu_custom_call.1} parent=11 // pred_region
          _
        $region36: #{tpu_custom_call.1} parent=11 // pred_fallthru
          _
        // Predicated region
        $region37: #{tpu_custom_call.1} parent=11 // pred_check
          %p359 = pneg %p195
        $region38: #{tpu_custom_call.1} parent=11 // pred_check_branch
          %361 = sbr.rel (%p359) target = $region40
        $region39: #{tpu_custom_call.1} parent=11 // pred_region
          _
        $region40: #{tpu_custom_call.1} parent=11 // pred_fallthru
          _
        // Predicated region
        $region41: #{tpu_custom_call.1} parent=11 // pred_check
          %p362 = pneg %p216
        $region42: #{tpu_custom_call.1} parent=11 // pred_check_branch
          %364 = sbr.rel (%p362) target = $region44
        $region43: #{tpu_custom_call.1} parent=11 // pred_region
          _
        $region44: #{tpu_custom_call.1} parent=11 // pred_fallthru
          _
        // Predicated region
        $region45: #{tpu_custom_call.1} parent=11 // pred_check
          %p365 = pneg %p237
        $region46: #{tpu_custom_call.1} parent=11 // pred_check_branch
          %367 = sbr.rel (%p365) target = $region48
        $region47: #{tpu_custom_call.1} parent=11 // pred_region
          _
        $region48: #{tpu_custom_call.1} parent=11 // pred_fallthru
          _
        // Predicated region
        $region49: #{tpu_custom_call.1} parent=11 // pred_check
          %p368 = pneg %p258
        $region50: #{tpu_custom_call.1} parent=11 // pred_check_branch
          %370 = sbr.rel (%p368) target = $region52
        $region51: #{tpu_custom_call.1} parent=11 // pred_region
          _
        $region52: #{tpu_custom_call.1} parent=11 // pred_fallthru
          _
        // Predicated region
        $region53: #{tpu_custom_call.1} parent=11 // pred_check
          %p371 = pneg %p279
        $region54: #{tpu_custom_call.1} parent=11 // pred_check_branch
          %373 = sbr.rel (%p371) target = $region56
        $region55: #{tpu_custom_call.1} parent=11 // pred_region
          _
        $region56: #{tpu_custom_call.1} parent=11 // pred_fallthru
          _
        // Predicated region
        $region57: #{tpu_custom_call.1} parent=11 // pred_check
          %p374 = pneg %p300
        $region58: #{tpu_custom_call.1} parent=11 // pred_check_branch
          %376 = sbr.rel (%p374) target = $region60
        $region59: #{tpu_custom_call.1} parent=11 // pred_region
          _
        $region60: #{tpu_custom_call.1} parent=11 // pred_fallthru
          _
      $region12: #{tpu_custom_call.1} parent=5 // pred_fallthru
        _
      %p377 = scmp.lt.s32.totalorder %s22, 2
      // Predicated region
      $region61: #{tpu_custom_call.1} parent=5 // pred_check
        %p378 = pneg %p377
      $region62: #{tpu_custom_call.1} parent=5 // pred_check_branch
        %380 = sbr.rel (%p378) target = $region64
      $region63: #{tpu_custom_call.1} parent=5 // pred_region
        // Predicated region
        $region65: #{tpu_custom_call.1} parent=63 // pred_check
          %p381 = pneg %p42
        $region66: #{tpu_custom_call.1} parent=63 // pred_check_branch
          %383 = sbr.rel (%p381) target = $region68
        $region67: #{tpu_custom_call.1} parent=63 // pred_region
          %p384 = scmp.lt.s32.totalorder %s22, 1
          %s385 = scalar_select %p384, %s22, 1
          %s386 = smul.addr %s385, 8
          %s387 = scalar_lea.vmem %s0, %s386
        $region68: #{tpu_custom_call.1} parent=63 // pred_fallthru
          _
      $region64: #{tpu_custom_call.1} parent=5 // pred_fallthru
        _
      %p388 = scmp.le.s32.totalorder 1, %s22
      %p389 = scmp.lt.s32.totalorder %s22, 3
      %p390 = pnand %p388, %p389
      %p391 = pneg %p390
      // Predicated region
      $region69: #{tpu_custom_call.1} parent=5 // pred_check
        _
      $region70: #{tpu_custom_call.1} parent=5 // pred_check_branch
        %393 = sbr.rel (%p390) target = $region72
      $region71: #{tpu_custom_call.1} parent=5 // pred_region
        %s394 = ssub.s32 %s22, 1
        %p395 = scmp.lt.s32.totalorder %s27, 1
        %s396 = scalar_select %p395, %s27, 1
        %s397 = smul.addr %s396, 8
        %s398 = scalar_lea.vmem %s0, %s397
        %p399 = pneg %p48
        %p400 = pneg %p45
        %p401 = pneg %p69
        %p402 = pneg %p66
        %p403 = pneg %p90
        %p404 = pneg %p87
        %p405 = pneg %p111
        %p406 = pneg %p108
        %p407 = pneg %p132
        %p408 = pneg %p129
        %p409 = pneg %p153
        %p410 = pneg %p150
        %p411 = pneg %p174
        %p412 = pneg %p171
        %p413 = pneg %p195
        %p414 = pneg %p192
        %p415 = pneg %p216
        %p416 = pneg %p213
        %p417 = pneg %p237
        %p418 = pneg %p234
        %p419 = pneg %p258
        %p420 = pneg %p255
        %p421 = pneg %p279
        %p422 = pneg %p276
        %p423 = pneg %p300
        %p424 = pneg %p297
        %p425 = pneg %p326
        %p426 = pneg %p323
        %s427 = sand.u32 %s313, 1
        %s428 = scalar_lea.sflag [#allocation3], %s427
        %s429 = sand.u32 %s313, 1
        %s430 = smul.addr %s429, 8
        %s431 = scalar_lea.vmem [#allocation2], %s430
        %p432 = scmp.lt.s32.totalorder %s27, 1
        %s433 = scalar_select %p432, %s27, 1
        %s434 = smul.addr %s433, 8
        %s435 = scalar_lea.vmem %s0, %s434
        %v437 = vld [vmem:[%s435] sm:$0xff]
        %v438 = vld [vmem:[%s1] sm:$0x1]
        %v439 = vld [vmem:[%s2] sm:$0x1]
        %vm440 = vcmask 261120
        %v441 = vsel %vm440, %v437, 0.0
        %442 = vadd.xlane.f32.xlu0 %v441
        %v443 = vpop.xlane.xlu0 %442
        %v444 = vrcp.pop 32.0
        %v445 = vmul.f32 32.0, %v444
        %v446 = vsub.f32 1.0, %v445
        %v447 = vmul.f32 %v444, %v446
        %v448 = vadd.f32 %v444, %v447
        %vm449 = vweird.f32 %v444
        %v450 = vsel %vm449, %v444, %v448
        %v451 = vmul.f32 %v443, %v450
        %v452 = vsub.f32 %v437, %v451
        %v453 = vmul.f32 %v452, %v452
        %v454 = vsel %vm440, %v453, 0.0
        %455 = vadd.xlane.f32.xlu0 %v454
        %v456 = vpop.xlane.xlu0 %455
        %v457 = vmul.f32 %v456, %v450
        %v458 = vadd.f32 %v457, 1e-05
        %v459 = vrsqrt.pop %v458
        %v460 = vmul.f32 %v459, %v458
        %v461 = vmul.f32 %v460, %v459
        %v462 = vmul.f32 0.5, %v461
        %v463 = vsub.f32 1.5, %v462
        %v464 = vmul.f32 %v459, %v463
        %vm465 = vweird.f32 %v458
        %vm466 = vweird.f32 %v459
        %vm467 = vmor %vm465, %vm466
        %v468 = vsel %vm467, %v459, %v464
        %v469 = vmul.f32 %v452, %v468
        %v471 = vperm.slane %v438, 0
        %v473 = vmul.f32 %v469, %v471
        %v475 = vperm.slane %v439, 0
        %v477 = vadd.f32 %v473, %v475
        %v478 = vpack.c.bf16 %v477, %v477
        %v479 = vld [vmem:[%s3] sm:$0xf]
        %v480 = vld [vmem:[%s3 + $0x4] sm:$0xf]
        %v481 = vld [vmem:[%s3 + $0x8] sm:$0xf]
        %v482 = vld [vmem:[%s3 + $0xc] sm:$0xf]
        %v483 = vld [vmem:[%s4] sm:$0x1]
        %v485 = vperm.slane %v483, 0
        %v491 = vunpack.c.l.b16 %v479
        %v492 = vunpack.c.l.b16 %v480
        %v493 = vunpack.c.l.b16 %v481
        %v494 = vunpack.c.l.b16 %v482
        %v495 = vpack.c.b16 %v492, %v491
        %v496 = vpack.c.b16 %v494, %v493
        %v500 = vsel %vm440, %v478, 0
        %502 = vmatpush.bf16.msra.mxu0 0
        %503 = vmatpush.bf16.msra.mxu0 0
        %504 = vmatpush.bf16.msra.mxu0 0
        %505 = vmatpush.bf16.msra.mxu0 0
        %506 = vmatpush.bf16.msra.mxu0 0
        %507 = vmatpush.bf16.msra.mxu0 0
        %508 = vmatpush.bf16.msra.mxu0 %v496
        %509 = vmatpush.bf16.msra.mxu0 %v495
        %510 = vmatmul.bf16.gmra.mxu0 %v500
        %v511 = vpop.f32.mrf.mxu0
        %v512 = vadd.f32 %v485, %v511
        %v513 = vpop.f32.mrf.mxu0
        %514 = vdwg.mxu0
        %v515 = vpack.c.bf16 %v512, %v512
        %v516 = vlaneseq
        %v517 = vshrl.u32 %v516, 7
        %v518 = vlaneseq
        %v519 = vand.u32 %v518, 127
        %vm520 = vcmp.le.s32.totalorder %v519, %v517
        %v522 = vunpack.c.l.b16 %v515
        %v523 = vpack.c.b16 %v522, %v522
        %524 = vrot.lane.b32.xlu0 %v523, 96
        %v525 = vpop.permute.xlu0 %524
        %vm526 = vcmask 64512
        %v528 = vsel %vm526, %v515, 0
        %v531 = vsel %vm526, %v525, 0
        %533 = vmatpush.bf16.xpose.msra.mxu0 0
        %534 = vmatpush.bf16.xpose.msra.mxu0 0
        %535 = vmatpush.bf16.xpose.msra.mxu0 0
        %536 = vmatpush.bf16.xpose.msra.mxu0 0
        %537 = vmatpush.bf16.xpose.msra.mxu0 0
        %538 = vmatpush.bf16.xpose.msra.mxu0 0
        %539 = vmatpush.bf16.xpose.msra.mxu0 0
        %540 = vmatpush.bf16.xpose.msra.mxu0 %v531
        %541 = vmatmul.bf16.gmra.mxu0 %v528
        %v542 = vpop.f32.mrf.mxu0
        %v543 = vadd.f32 0.0, %v542
        %v544 = vpop.f32.mrf.mxu0
        %545 = vdwg.mxu0
        %v546 = vsel %vm520, %v543, -inf
        %v547 = vsel %vm526, %v546, -inf
        %548 = vmax.xlane.f32.xlu0 %v547
        %v549 = vpop.xlane.xlu0 %548
        %v550 = vsub.f32 %v546, %v549
        %v551 = vmul.f32 %v550, 1.442695
        %v552 = vpow.pop %v551
        %v553 = vsel %vm526, %v552, 0.0
        %554 = vadd.xlane.f32.xlu0 %v553
        %v555 = vpop.xlane.xlu0 %554
        %v556 = vpack.c.bf16 %v552, %v552
        %557 = vrot.lane.b32.xlu0 %v523, 64
        %v558 = vpop.permute.xlu0 %557
        %v560 = vsel %vm526, %v556, 0
        %vm562 = vcmask 1043456
        %v564 = vsel %vm562, %v558, 0
        %566 = vmatpush.bf16.msra.mxu0 0
        %567 = vmatpush.bf16.msra.mxu0 0
        %568 = vmatpush.bf16.msra.mxu0 0
        %569 = vmatpush.bf16.msra.mxu0 0
        %570 = vmatpush.bf16.msra.mxu0 0
        %571 = vmatpush.bf16.msra.mxu0 0
        %572 = vmatpush.bf16.msra.mxu0 0
        %573 = vmatpush.bf16.msra.mxu0 %v564
        %574 = vmatmul.bf16.gmra.mxu0 %v560
        %v575 = vpop.f32.mrf.mxu0
        %v576 = vadd.f32 0.0, %v575
        %v577 = vpop.f32.mrf.mxu0
        %578 = vdwg.mxu0
        %v579 = vrcp.pop %v555
        %v580 = vmul.f32 %v555, %v579
        %v581 = vsub.f32 1.0, %v580
        %v582 = vmul.f32 %v579, %v581
        %v583 = vadd.f32 %v579, %v582
        %vm584 = vweird.f32 %v555
        %vm585 = vweird.f32 %v579
        %vm586 = vmor %vm584, %vm585
        %v587 = vsel %vm586, %v579, %v583
        %v588 = vand.u32 2147483647, %v555
        %vm589 = vcmp.eq.f32.partialorder %v588, 8.507059e+37
        %v590 = vand.u32 %v555, 2147483648
        %v591 = vor.u32 1.1754944e-38, %v590
        %v592 = vsel %vm589, %v591, %v587
        %v593 = vmul.f32 1.0, %v592
        %v594 = vmul.f32 %v576, %v593
        %v595 = vpack.c.bf16 %v594, %v594
        %v596 = vld [vmem:[%s5] sm:$0xf]
        %597 = vrot.lane.b32.xlu0 %v523, 120
        %v598 = vpop.permute.xlu0 %597
        %599 = vrot.lane.b32.xlu0 %v523, 88
        %v600 = vpop.permute.xlu0 %599
        %v602 = vsel %vm526, %v598, 0
        %v605 = vsel %vm526, %v600, 0
        %607 = vmatpush.bf16.xpose.msra.mxu0 0
        %608 = vmatpush.bf16.xpose.msra.mxu0 0
        %609 = vmatpush.bf16.xpose.msra.mxu0 0
        %610 = vmatpush.bf16.xpose.msra.mxu0 0
        %611 = vmatpush.bf16.xpose.msra.mxu0 0
        %612 = vmatpush.bf16.xpose.msra.mxu0 0
        %613 = vmatpush.bf16.xpose.msra.mxu0 0
        %614 = vmatpush.bf16.xpose.msra.mxu0 %v605
        %615 = vmatmul.bf16.gmra.mxu0 %v602
        %v616 = vpop.f32.mrf.mxu0
        %v617 = vadd.f32 0.0, %v616
        %v618 = vpop.f32.mrf.mxu0
        %619 = vdwg.mxu0
        %v620 = vsel %vm520, %v617, -inf
        %v621 = vsel %vm526, %v620, -inf
        %622 = vmax.xlane.f32.xlu0 %v621
        %v623 = vpop.xlane.xlu0 %622
        %v624 = vsub.f32 %v620, %v623
        %v625 = vmul.f32 %v624, 1.442695
        %v626 = vpow.pop %v625
        %v627 = vsel %vm526, %v626, 0.0
        %628 = vadd.xlane.f32.xlu0 %v627
        %v629 = vpop.xlane.xlu0 %628
        %v630 = vpack.c.bf16 %v626, %v626
        %631 = vrot.lane.b32.xlu0 %v523, 56
        %v632 = vpop.permute.xlu0 %631
        %v634 = vsel %vm526, %v630, 0
        %v637 = vsel %vm562, %v632, 0
        %639 = vmatpush.bf16.msra.mxu0 0
        %640 = vmatpush.bf16.msra.mxu0 0
        %641 = vmatpush.bf16.msra.mxu0 0
        %642 = vmatpush.bf16.msra.mxu0 0
        %643 = vmatpush.bf16.msra.mxu0 0
        %644 = vmatpush.bf16.msra.mxu0 0
        %645 = vmatpush.bf16.msra.mxu0 0
        %646 = vmatpush.bf16.msra.mxu0 %v637
        %647 = vmatmul.bf16.gmra.mxu0 %v634
        %v648 = vpop.f32.mrf.mxu0
        %v649 = vadd.f32 0.0, %v648
        %v650 = vpop.f32.mrf.mxu0
        %651 = vdwg.mxu0
        %v652 = vrcp.pop %v629
        %v653 = vmul.f32 %v629, %v652
        %v654 = vsub.f32 1.0, %v653
        %v655 = vmul.f32 %v652, %v654
        %v656 = vadd.f32 %v652, %v655
        %vm657 = vweird.f32 %v629
        %vm658 = vweird.f32 %v652
        %vm659 = vmor %vm657, %vm658
        %v660 = vsel %vm659, %v652, %v656
        %v661 = vand.u32 2147483647, %v629
        %vm662 = vcmp.eq.f32.partialorder %v661, 8.507059e+37
        %v663 = vand.u32 %v629, 2147483648
        %v664 = vor.u32 1.1754944e-38, %v663
        %v665 = vsel %vm662, %v664, %v660
        %v666 = vmul.f32 1.0, %v665
        %v667 = vmul.f32 %v649, %v666
        %v668 = vpack.c.bf16 %v667, %v667
        %s669 = scalar_lea.vmem %s5, 4
        %v670 = vld [vmem:[%s669] sm:$0xf]
        %v672 = vsel %vm526, %v668, 0
        %v675 = vsel %vm562, %v670, 0
        %677 = vmatpush.bf16.msra.mxu0 0
        %678 = vmatpush.bf16.msra.mxu0 0
        %679 = vmatpush.bf16.msra.mxu0 0
        %680 = vmatpush.bf16.msra.mxu0 0
        %681 = vmatpush.bf16.msra.mxu0 0
        %682 = vmatpush.bf16.msra.mxu0 0
        %683 = vmatpush.bf16.msra.mxu0 0
        %684 = vmatpush.bf16.msra.mxu0 %v675
        %685 = vmatmul.bf16.gmra.mxu0 %v672
        %v686 = vpop.f32.mrf.mxu0
        %v687 = vadd.f32 0.0, %v686
        %v688 = vpop.f32.mrf.mxu0
        %689 = vdwg.mxu0
        %v691 = vsel %vm526, %v595, 0
        %v694 = vsel %vm562, %v596, 0
        %696 = vmatpush.bf16.msra.mxu0 0
        %697 = vmatpush.bf16.msra.mxu0 0
        %698 = vmatpush.bf16.msra.mxu0 0
        %699 = vmatpush.bf16.msra.mxu0 0
        %700 = vmatpush.bf16.msra.mxu0 0
        %701 = vmatpush.bf16.msra.mxu0 0
        %702 = vmatpush.bf16.msra.mxu0 0
        %703 = vmatpush.bf16.msra.mxu0 %v694
        %704 = vmatmul.bf16.gmra.mxu0 %v691
        %v705 = vpop.f32.mrf.mxu0
        %v706 = vadd.f32 %v687, %v705
        %v707 = vpop.f32.mrf.mxu0
        %708 = vdwg.mxu0
        %709 = vrot.lane.b32.xlu0 %v523, 112
        %v710 = vpop.permute.xlu0 %709
        %711 = vrot.lane.b32.xlu0 %v523, 80
        %v712 = vpop.permute.xlu0 %711
        %v714 = vsel %vm526, %v710, 0
        %v717 = vsel %vm526, %v712, 0
        %719 = vmatpush.bf16.xpose.msra.mxu0 0
        %720 = vmatpush.bf16.xpose.msra.mxu0 0
        %721 = vmatpush.bf16.xpose.msra.mxu0 0
        %722 = vmatpush.bf16.xpose.msra.mxu0 0
        %723 = vmatpush.bf16.xpose.msra.mxu0 0
        %724 = vmatpush.bf16.xpose.msra.mxu0 0
        %725 = vmatpush.bf16.xpose.msra.mxu0 0
        %726 = vmatpush.bf16.xpose.msra.mxu0 %v717
        %727 = vmatmul.bf16.gmra.mxu0 %v714
        %v728 = vpop.f32.mrf.mxu0
        %v729 = vadd.f32 0.0, %v728
        %v730 = vpop.f32.mrf.mxu0
        %731 = vdwg.mxu0
        %v732 = vsel %vm520, %v729, -inf
        %v733 = vsel %vm526, %v732, -inf
        %734 = vmax.xlane.f32.xlu0 %v733
        %v735 = vpop.xlane.xlu0 %734
        %v736 = vsub.f32 %v732, %v735
        %v737 = vmul.f32 %v736, 1.442695
        %v738 = vpow.pop %v737
        %v739 = vsel %vm526, %v738, 0.0
        %740 = vadd.xlane.f32.xlu0 %v739
        %v741 = vpop.xlane.xlu0 %740
        %v742 = vpack.c.bf16 %v738, %v738
        %743 = vrot.lane.b32.xlu0 %v523, 48
        %v744 = vpop.permute.xlu0 %743
        %v746 = vsel %vm526, %v742, 0
        %v749 = vsel %vm562, %v744, 0
        %751 = vmatpush.bf16.msra.mxu0 0
        %752 = vmatpush.bf16.msra.mxu0 0
        %753 = vmatpush.bf16.msra.mxu0 0
        %754 = vmatpush.bf16.msra.mxu0 0
        %755 = vmatpush.bf16.msra.mxu0 0
        %756 = vmatpush.bf16.msra.mxu0 0
        %757 = vmatpush.bf16.msra.mxu0 0
        %758 = vmatpush.bf16.msra.mxu0 %v749
        %759 = vmatmul.bf16.gmra.mxu0 %v746
        %v760 = vpop.f32.mrf.mxu0
        %v761 = vadd.f32 0.0, %v760
        %v762 = vpop.f32.mrf.mxu0
        %763 = vdwg.mxu0
        %v764 = vrcp.pop %v741
        %v765 = vmul.f32 %v741, %v764
        %v766 = vsub.f32 1.0, %v765
        %v767 = vmul.f32 %v764, %v766
        %v768 = vadd.f32 %v764, %v767
        %vm769 = vweird.f32 %v741
        %vm770 = vweird.f32 %v764
        %vm771 = vmor %vm769, %vm770
        %v772 = vsel %vm771, %v764, %v768
        %v773 = vand.u32 2147483647, %v741
        %vm774 = vcmp.eq.f32.partialorder %v773, 8.507059e+37
        %v775 = vand.u32 %v741, 2147483648
        %v776 = vor.u32 1.1754944e-38, %v775
        %v777 = vsel %vm774, %v776, %v772
        %v778 = vmul.f32 1.0, %v777
        %v779 = vmul.f32 %v761, %v778
        %v780 = vpack.c.bf16 %v779, %v779
        %s781 = scalar_lea.vmem %s5, 8
        %v782 = vld [vmem:[%s781] sm:$0xf]
        %v784 = vsel %vm526, %v780, 0
        %v787 = vsel %vm562, %v782, 0
        %789 = vmatpush.bf16.msra.mxu0 0
        %790 = vmatpush.bf16.msra.mxu0 0
        %791 = vmatpush.bf16.msra.mxu0 0
        %792 = vmatpush.bf16.msra.mxu0 0
        %793 = vmatpush.bf16.msra.mxu0 0
        %794 = vmatpush.bf16.msra.mxu0 0
        %795 = vmatpush.bf16.msra.mxu0 0
        %796 = vmatpush.bf16.msra.mxu0 %v787
        %797 = vmatmul.bf16.gmra.mxu0 %v784
        %v798 = vpop.f32.mrf.mxu0
        %v799 = vadd.f32 0.0, %v798
        %v800 = vpop.f32.mrf.mxu0
        %801 = vdwg.mxu0
        %v802 = vadd.f32 %v706, %v799
        %803 = vrot.lane.b32.xlu0 %v523, 104
        %v804 = vpop.permute.xlu0 %803
        %805 = vrot.lane.b32.xlu0 %v523, 72
        %v806 = vpop.permute.xlu0 %805
        %v808 = vsel %vm526, %v804, 0
        %v811 = vsel %vm526, %v806, 0
        %813 = vmatpush.bf16.xpose.msra.mxu0 0
        %814 = vmatpush.bf16.xpose.msra.mxu0 0
        %815 = vmatpush.bf16.xpose.msra.mxu0 0
        %816 = vmatpush.bf16.xpose.msra.mxu0 0
        %817 = vmatpush.bf16.xpose.msra.mxu0 0
        %818 = vmatpush.bf16.xpose.msra.mxu0 0
        %819 = vmatpush.bf16.xpose.msra.mxu0 0
        %820 = vmatpush.bf16.xpose.msra.mxu0 %v811
        %821 = vmatmul.bf16.gmra.mxu0 %v808
        %v822 = vpop.f32.mrf.mxu0
        %v823 = vadd.f32 0.0, %v822
        %v824 = vpop.f32.mrf.mxu0
        %825 = vdwg.mxu0
        %v826 = vsel %vm520, %v823, -inf
        %v827 = vsel %vm526, %v826, -inf
        %828 = vmax.xlane.f32.xlu0 %v827
        %v829 = vpop.xlane.xlu0 %828
        %v830 = vsub.f32 %v826, %v829
        %v831 = vmul.f32 %v830, 1.442695
        %v832 = vpow.pop %v831
        %v833 = vsel %vm526, %v832, 0.0
        %834 = vadd.xlane.f32.xlu0 %v833
        %v835 = vpop.xlane.xlu0 %834
        %v836 = vpack.c.bf16 %v832, %v832
        %837 = vrot.lane.b32.xlu0 %v523, 40
        %v838 = vpop.permute.xlu0 %837
        %v840 = vsel %vm526, %v836, 0
        %v843 = vsel %vm562, %v838, 0
        %845 = vmatpush.bf16.msra.mxu0 0
        %846 = vmatpush.bf16.msra.mxu0 0
        %847 = vmatpush.bf16.msra.mxu0 0
        %848 = vmatpush.bf16.msra.mxu0 0
        %849 = vmatpush.bf16.msra.mxu0 0
        %850 = vmatpush.bf16.msra.mxu0 0
        %851 = vmatpush.bf16.msra.mxu0 0
        %852 = vmatpush.bf16.msra.mxu0 %v843
        %853 = vmatmul.bf16.gmra.mxu0 %v840
        %v854 = vpop.f32.mrf.mxu0
        %v855 = vadd.f32 0.0, %v854
        %v856 = vpop.f32.mrf.mxu0
        %857 = vdwg.mxu0
        %v858 = vrcp.pop %v835
        %v859 = vmul.f32 %v835, %v858
        %v860 = vsub.f32 1.0, %v859
        %v861 = vmul.f32 %v858, %v860
        %v862 = vadd.f32 %v858, %v861
        %vm863 = vweird.f32 %v835
        %vm864 = vweird.f32 %v858
        %vm865 = vmor %vm863, %vm864
        %v866 = vsel %vm865, %v858, %v862
        %v867 = vand.u32 2147483647, %v835
        %vm868 = vcmp.eq.f32.partialorder %v867, 8.507059e+37
        %v869 = vand.u32 %v835, 2147483648
        %v870 = vor.u32 1.1754944e-38, %v869
        %v871 = vsel %vm868, %v870, %v866
        %v872 = vmul.f32 1.0, %v871
        %v873 = vmul.f32 %v855, %v872
        %v874 = vpack.c.bf16 %v873, %v873
        %s875 = scalar_lea.vmem %s5, 12
        %v876 = vld [vmem:[%s875] sm:$0xf]
        %v878 = vsel %vm526, %v874, 0
        %v881 = vsel %vm562, %v876, 0
        %883 = vmatpush.bf16.msra.mxu0 0
        %884 = vmatpush.bf16.msra.mxu0 0
        %885 = vmatpush.bf16.msra.mxu0 0
        %886 = vmatpush.bf16.msra.mxu0 0
        %887 = vmatpush.bf16.msra.mxu0 0
        %888 = vmatpush.bf16.msra.mxu0 0
        %889 = vmatpush.bf16.msra.mxu0 0
        %890 = vmatpush.bf16.msra.mxu0 %v881
        %891 = vmatmul.bf16.gmra.mxu0 %v878
        %v892 = vpop.f32.mrf.mxu0
        %v893 = vadd.f32 0.0, %v892
        %v894 = vpop.f32.mrf.mxu0
        %895 = vdwg.mxu0
        %v896 = vadd.f32 %v802, %v893
        %v897 = vld [vmem:[%s6] sm:$0x1]
        %v899 = vperm.slane %v897, 0
        %v901 = vadd.f32 %v896, %v899
        %v902 = vadd.f32 %v901, %v437
        %v903 = vld [vmem:[%s7] sm:$0x1]
        %v904 = vld [vmem:[%s8] sm:$0x1]
        %v905 = vsel %vm440, %v902, 0.0
        %906 = vadd.xlane.f32.xlu0 %v905
        %v907 = vpop.xlane.xlu0 %906
        %v908 = vmul.f32 %v907, %v450
        %v909 = vsub.f32 %v902, %v908
        %v910 = vmul.f32 %v909, %v909
        %v911 = vsel %vm440, %v910, 0.0
        %912 = vadd.xlane.f32.xlu0 %v911
        %v913 = vpop.xlane.xlu0 %912
        %v914 = vmul.f32 %v913, %v450
        %v915 = vadd.f32 %v914, 1e-05
        %v916 = vrsqrt.pop %v915
        %v917 = vmul.f32 %v916, %v915
        %v918 = vmul.f32 %v917, %v916
        %v919 = vmul.f32 0.5, %v918
        %v920 = vsub.f32 1.5, %v919
        %v921 = vmul.f32 %v916, %v920
        %vm922 = vweird.f32 %v915
        %vm923 = vweird.f32 %v916
        %vm924 = vmor %vm922, %vm923
        %v925 = vsel %vm924, %v916, %v921
        %v926 = vmul.f32 %v909, %v925
        %v928 = vperm.slane %v903, 0
        %v930 = vmul.f32 %v926, %v928
        %v932 = vperm.slane %v904, 0
        %v934 = vadd.f32 %v930, %v932
        %v935 = vpack.c.bf16 %v934, %v934
        %v936 = vld [vmem:[%s9] sm:$0xf]
        %v937 = vld [vmem:[%s9 + $0x4] sm:$0xf]
        %v938 = vld [vmem:[%s9 + $0x8] sm:$0xf]
        %v939 = vld [vmem:[%s9 + $0xc] sm:$0xf]
        %v940 = vld [vmem:[%s10] sm:$0x1]
        %v942 = vperm.slane %v940, 0
        %v948 = vunpack.c.l.b16 %v936
        %v949 = vunpack.c.l.b16 %v937
        %v950 = vunpack.c.l.b16 %v938
        %v951 = vunpack.c.l.b16 %v939
        %v952 = vpack.c.b16 %v949, %v948
        %v953 = vpack.c.b16 %v951, %v950
        %v957 = vsel %vm440, %v935, 0
        %959 = vmatpush.bf16.msra.mxu0 0
        %960 = vmatpush.bf16.msra.mxu0 0
        %961 = vmatpush.bf16.msra.mxu0 0
        %962 = vmatpush.bf16.msra.mxu0 0
        %963 = vmatpush.bf16.msra.mxu0 0
        %964 = vmatpush.bf16.msra.mxu0 0
        %965 = vmatpush.bf16.msra.mxu0 %v953
        %966 = vmatpush.bf16.msra.mxu0 %v952
        %967 = vmatmul.bf16.gmra.mxu0 %v957
        %v968 = vpop.f32.mrf.mxu0
        %v969 = vadd.f32 %v942, %v968
        %v970 = vpop.f32.mrf.mxu0
        %971 = vdwg.mxu0
        %v972 = vmul.f32 %v969, -1.702
        %v973 = vmul.f32 %v972, 1.442695
        %v974 = vpow.pop %v973
        %v975 = vadd.f32 %v974, 1.0
        %v976 = vrcp.pop %v975
        %v977 = vmul.f32 %v969, %v976
        %v978 = vpack.c.bf16 %v977, %v977
        %v979 = vld [vmem:[%s11] sm:$0xf]
        %v980 = vld [vmem:[%s11 + $0x4] sm:$0xf]
        %v981 = vld [vmem:[%s11 + $0x8] sm:$0xf]
        %v982 = vld [vmem:[%s11 + $0xc] sm:$0xf]
        %v983 = vld [vmem:[%s11 + $0x10] sm:$0xf]
        %v984 = vld [vmem:[%s11 + $0x14] sm:$0xf]
        %v985 = vld [vmem:[%s11 + $0x18] sm:$0xf]
        %v986 = vld [vmem:[%s11 + $0x1c] sm:$0xf]
        %v987 = vld [vmem:[%s11 + $0x20] sm:$0xf]
        %v988 = vld [vmem:[%s11 + $0x24] sm:$0xf]
        %v989 = vld [vmem:[%s11 + $0x28] sm:$0xf]
        %v990 = vld [vmem:[%s11 + $0x2c] sm:$0xf]
        %v991 = vld [vmem:[%s11 + $0x30] sm:$0xf]
        %v992 = vld [vmem:[%s11 + $0x34] sm:$0xf]
        %v993 = vld [vmem:[%s11 + $0x38] sm:$0xf]
        %v994 = vld [vmem:[%s11 + $0x3c] sm:$0xf]
        %v995 = vld [vmem:[%s12] sm:$0x1]
        %v997 = vperm.slane %v995, 0
        %v1015 = vunpack.c.l.b16 %v979
        %v1016 = vunpack.c.l.b16 %v980
        %v1017 = vunpack.c.l.b16 %v981
        %v1018 = vunpack.c.l.b16 %v982
        %v1019 = vunpack.c.l.b16 %v983
        %v1020 = vunpack.c.l.b16 %v984
        %v1021 = vunpack.c.l.b16 %v985
        %v1022 = vunpack.c.l.b16 %v986
        %v1023 = vunpack.c.l.b16 %v987
        %v1024 = vunpack.c.l.b16 %v988
        %v1025 = vunpack.c.l.b16 %v989
        %v1026 = vunpack.c.l.b16 %v990
        %v1027 = vunpack.c.l.b16 %v991
        %v1028 = vunpack.c.l.b16 %v992
        %v1029 = vunpack.c.l.b16 %v993
        %v1030 = vunpack.c.l.b16 %v994
        %v1031 = vpack.c.b16 %v1016, %v1015
        %v1032 = vpack.c.b16 %v1018, %v1017
        %v1033 = vpack.c.b16 %v1020, %v1019
        %v1034 = vpack.c.b16 %v1022, %v1021
        %v1035 = vpack.c.b16 %v1024, %v1023
        %v1036 = vpack.c.b16 %v1026, %v1025
        %v1037 = vpack.c.b16 %v1028, %v1027
        %v1038 = vpack.c.b16 %v1030, %v1029
        %1047 = vmatpush.bf16.msra.mxu0 %v1038
        %1048 = vmatpush.bf16.msra.mxu0 %v1037
        %1049 = vmatpush.bf16.msra.mxu0 %v1036
        %1050 = vmatpush.bf16.msra.mxu0 %v1035
        %1051 = vmatpush.bf16.msra.mxu0 %v1034
        %1052 = vmatpush.bf16.msra.mxu0 %v1033
        %1053 = vmatpush.bf16.msra.mxu0 %v1032
        %1054 = vmatpush.bf16.msra.mxu0 %v1031
        %1055 = vmatmul.bf16.gmra.mxu0 %v978
        %v1056 = vpop.f32.mrf.mxu0
        %v1057 = vadd.f32 %v997, %v1056
        %v1058 = vpop.f32.mrf.mxu0
        %1059 = vdwg.mxu0
        %v1060 = vadd.f32 %v1057, %v902
        %1061 = vst.msk [vmem:[%s431] sm:$0xff] %vm440, %v1060
        %s1062 = sand.u32 %s313, 1
        %s1063 = scalar_lea.sflag [#allocation3], %s1062
        %s1064 = sand.u32 %s313, 1
        %s1065 = smul.addr %s1064, 8
        %s1066 = scalar_lea.vmem [#allocation2], %s1065
        // Predicated region
        $region73: #{tpu_custom_call.1} parent=71 // pred_check
          %p1067 = pneg %p323
        $region74: #{tpu_custom_call.1} parent=71 // pred_check_branch
          %1069 = sbr.rel (%p1067) target = $region76
        $region75: #{tpu_custom_call.1} parent=71 // pred_region
          %1071 = vsyncadd %s1063, 0
          %s1072 = smul.addr %s27, 8
          %s1073 = scalar_lea.hbm %s13, %s1072
          %s1075 = sshll.u32 %s1066, 4
          %s1076 = int_to_ptr.vmem [resolvable:$true] %s1075
          %s1077 = sshll.u32 %s1073, 4
          %s1078 = int_to_ptr.hbm [resolvable:$true] %s1077
          %1080 = dma.vmem_to_hbm [thread:$0]  %s1076, 128, %s1078, %s1063
        $region76: #{tpu_custom_call.1} parent=71 // pred_fallthru
          _
      $region72: #{tpu_custom_call.1} parent=5 // pred_fallthru
        _
      %p1081 = scmp.le.s32.totalorder 2, %s22
      // Predicated region
      $region77: #{tpu_custom_call.1} parent=5 // pred_check
        %p1082 = pneg %p1081
      $region78: #{tpu_custom_call.1} parent=5 // pred_check_branch
        %1084 = sbr.rel (%p1082) target = $region80
      $region79: #{tpu_custom_call.1} parent=5 // pred_region
        %s1085 = ssub.s32 %s22, 2
        // Predicated region
        $region81: #{tpu_custom_call.1} parent=79 // pred_check
          %p1086 = pneg %p329
        $region82: #{tpu_custom_call.1} parent=79 // pred_check_branch
          %1088 = sbr.rel (%p1086) target = $region84
        $region83: #{tpu_custom_call.1} parent=79 // pred_region
          %s1089 = sand.u32 %s314, 1
          %s1090 = scalar_lea.sflag [#allocation3], %s1089
          %s1091 = sand.u32 %s314, 1
          %s1092 = smul.addr %s1091, 8
          %s1093 = scalar_lea.vmem [#allocation2], %s1092
          %1095 = dma.done %s1090, 128
        $region84: #{tpu_custom_call.1} parent=79 // pred_fallthru
          _
      $region80: #{tpu_custom_call.1} parent=5 // pred_fallthru
        _
    $region6: #{tpu_custom_call.1} parent=1 // loop_footer
      %s26 = sadd.s32 1, %s22
    $region7: #{tpu_custom_call.1} parent=1 // loop_footer_branch
      %21 = sbr.rel target = $region3
    $region8: #{tpu_custom_call.1} parent=1 // loop_exit
      _
    %1096 = vsyncpa [#allocation3], 1
    %s1097 = scalar_lea.sflag [#allocation3], 1
    %1098 = vsyncpa %s1097, 1

// kernel: tpu_custom_call.1
$region0: #{tpu_custom_call.1}
  #allocation0 [shape = 'u32[]', space=smem, size = 0x4, offset = 0x4, fixed_abs, tag = 'smem constant byte address 0x4 - core index']
  #allocation1 [shape = 'u32[72,128]{1,0:T(1,128)}', space=vmem, size = 0x9000, scoped, tag = 'internal scratch']
  %s0 = inlined_call_operand.vmem [shape: f32[2,8,32], index: 0, kind: input, shape index: {}]
  %s1 = inlined_call_operand.vmem [shape: f32[1,32], index: 1, kind: input, shape index: {}]
  %s2 = inlined_call_operand.vmem [shape: f32[1,32], index: 2, kind: input, shape index: {}]
  %s3 = inlined_call_operand.vmem [shape: bf16[32,96], index: 3, kind: input, shape index: {}]
  %s4 = inlined_call_operand.vmem [shape: f32[1,96], index: 4, kind: input, shape index: {}]
  %s5 = inlined_call_operand.vmem [shape: bf16[4,8,32], index: 5, kind: input, shape index: {}]
  %s6 = inlined_call_operand.vmem [shape: f32[1,32], index: 6, kind: input, shape index: {}]
  %s7 = inlined_call_operand.vmem [shape: f32[1,32], index: 7, kind: input, shape index: {}]
  %s8 = inlined_call_operand.vmem [shape: f32[1,32], index: 8, kind: input, shape index: {}]
  %s9 = inlined_call_operand.vmem [shape: bf16[32,128], index: 9, kind: input, shape index: {}]
  %s10 = inlined_call_operand.vmem [shape: f32[1,128], index: 10, kind: input, shape index: {}]
  %s11 = inlined_call_operand.vmem [shape: bf16[128,32], index: 11, kind: input, shape index: {}]
  %s12 = inlined_call_operand.vmem [shape: f32[1,32], index: 12, kind: input, shape index: {}]
  %s13 = inlined_call_operand.hbm [shape: f32[2,8,32], index: 13, kind: output, shape index: {}]
  %s14 = sld [smem:[#allocation0]]
  $region85: #{tpu_custom_call.1} parent=0
    _
  %s16 = ssub.s32 1, %s14
  %s17 = scalar_select 0, %s16, %s14
  $region1: #{tpu_custom_call.1} parent=0
    #allocation2 [shape = 'u8[8192]{0}', space=vmem, size = 0x2000, scoped, tag = 'output window, operand 0']
    #allocation3 [shape = 's32[2]{0}', space=sflag, size = 0x8, scoped, tag = 'scoped memory for tpu_custom_call.1']
    %18 = vsyncpa [#allocation3], 0
    %s19 = scalar_lea.sflag [#allocation3], 1
    %20 = vsyncpa %s19, 0
    loop: start=0, step=1, limit=4
    $region2: #{tpu_custom_call.1} parent=1 // loop_pre_header
      _
    $region3: #{tpu_custom_call.1} parent=1 // loop_header
      %s22 = sphi 0, %s26
      %p23 = scmp.ge.s32.totalorder %s22, 4
      %s32 = sphi 0, %s34
      %s35 = sphi 0, %s32
      %s36 = sphi 0, %s35
      %s52 = sphi 0, %s36
      %s56 = sphi 0, %s56
      %s58 = sphi 0, %s56
      %s59 = sphi 0, %s58
      %s73 = sphi 0, %s59
      %s77 = sphi 0, %s77
      %s79 = sphi 0, %s77
      %s80 = sphi 0, %s79
      %s94 = sphi 0, %s80
      %s98 = sphi 0, %s98
      %s100 = sphi 0, %s98
      %s101 = sphi 0, %s100
      %s115 = sphi 0, %s101
      %s119 = sphi 0, %s119
      %s121 = sphi 0, %s119
      %s122 = sphi 0, %s121
      %s136 = sphi 0, %s122
      %s140 = sphi 0, %s140
      %s142 = sphi 0, %s140
      %s143 = sphi 0, %s142
      %s157 = sphi 0, %s143
      %s161 = sphi 0, %s161
      %s163 = sphi 0, %s161
      %s164 = sphi 0, %s163
      %s178 = sphi 0, %s164
      %s182 = sphi 0, %s182
      %s184 = sphi 0, %s182
      %s185 = sphi 0, %s184
      %s199 = sphi 0, %s185
      %s203 = sphi 0, %s203
      %s205 = sphi 0, %s203
      %s206 = sphi 0, %s205
      %s220 = sphi 0, %s206
      %s224 = sphi 0, %s224
      %s226 = sphi 0, %s224
      %s227 = sphi 0, %s226
      %s241 = sphi 0, %s227
      %s245 = sphi 0, %s245
      %s247 = sphi 0, %s245
      %s248 = sphi 0, %s247
      %s262 = sphi 0, %s248
      %s266 = sphi 0, %s266
      %s268 = sphi 0, %s266
      %s269 = sphi 0, %s268
      %s283 = sphi 0, %s269
      %s287 = sphi 0, %s287
      %s289 = sphi 0, %s287
      %s290 = sphi 0, %s289
      %s304 = sphi 0, %s290
      %s310 = sphi 0, %s312
      %s313 = sphi 0, %s310
      %s314 = sphi 0, %s313
      %s330 = sphi 0, %s314
    $region4: #{tpu_custom_call.1} parent=1 // loop_header_branch
      %25 = sbr.rel (%p23) target = $region8
    $region5: #{tpu_custom_call.1} parent=1 // loop_body
      %s27 = ssub.s32 %s22, 1
      %s28 = ssub.s32 %s22, 2
      %s29 = sadd.s32 %s22, 1
      %s30 = ssub.s32 %s22, %s29
      %p31 = scmp.eq.s32.totalorder %s30, 0
      %s33 = sadd.s32 %s32, 1
      %s34 = scalar_select %p31, %s32, %s33
      %p37 = pneg %p31
      %p38 = scmp.eq.s32.totalorder %s22, 1
      %p39 = por %p37, %p38
      %p40 = scmp.ne.s32.totalorder %s32, %s35
      %p41 = scmp.eq.s32.totalorder %s22, 0
      %p42 = por %p40, %p41
      %p43 = scmp.ne.s32.totalorder %s32, %s35
      %p44 = scmp.eq.s32.totalorder %s27, 1
      %p45 = por %p43, %p44
      %p46 = scmp.ne.s32.totalorder %s35, %s36
      %p47 = scmp.eq.s32.totalorder %s27, 0
      %p48 = por %p46, %p47
      %p49 = scmp.ne.s32.totalorder %s35, %s36
      %p50 = scmp.eq.s32.totalorder %s28, 1
      %p51 = por %p49, %p50
      %p53 = scmp.ne.s32.totalorder %s36, %s52
      %p54 = scmp.eq.s32.totalorder %s28, 0
      %p55 = por %p53, %p54
      %s57 = sadd.s32 %s56, 1
      %p60 = scmp.eq.s32.totalorder %s22, 1
      %p61 = scmp.ne.s32.totalorder %s56, %s58
      %p62 = scmp.eq.s32.totalorder %s22, 0
      %p63 = por %p61, %p62
      %p64 = scmp.ne.s32.totalorder %s56, %s58
      %p65 = scmp.eq.s32.totalorder %s27, 1
      %p66 = por %p64, %p65
      %p67 = scmp.ne.s32.totalorder %s58, %s59
      %p68 = scmp.eq.s32.totalorder %s27, 0
      %p69 = por %p67, %p68
      %p70 = scmp.ne.s32.totalorder %s58, %s59
      %p71 = scmp.eq.s32.totalorder %s28, 1
      %p72 = por %p70, %p71
      %p74 = scmp.ne.s32.totalorder %s59, %s73
      %p75 = scmp.eq.s32.totalorder %s28, 0
      %p76 = por %p74, %p75
      %s78 = sadd.s32 %s77, 1
      %p81 = scmp.eq.s32.totalorder %s22, 1
      %p82 = scmp.ne.s32.totalorder %s77, %s79
      %p83 = scmp.eq.s32.totalorder %s22, 0
      %p84 = por %p82, %p83
      %p85 = scmp.ne.s32.totalorder %s77, %s79
      %p86 = scmp.eq.s32.totalorder %s27, 1
      %p87 = por %p85, %p86
      %p88 = scmp.ne.s32.totalorder %s79, %s80
      %p89 = scmp.eq.s32.totalorder %s27, 0
      %p90 = por %p88, %p89
      %p91 = scmp.ne.s32.totalorder %s79, %s80
      %p92 = scmp.eq.s32.totalorder %s28, 1
      %p93 = por %p91, %p92
      %p95 = scmp.ne.s32.totalorder %s80, %s94
      %p96 = scmp.eq.s32.totalorder %s28, 0
      %p97 = por %p95, %p96
      %s99 = sadd.s32 %s98, 1
      %p102 = scmp.eq.s32.totalorder %s22, 1
      %p103 = scmp.ne.s32.totalorder %s98, %s100
      %p104 = scmp.eq.s32.totalorder %s22, 0
      %p105 = por %p103, %p104
      %p106 = scmp.ne.s32.totalorder %s98, %s100
      %p107 = scmp.eq.s32.totalorder %s27, 1
      %p108 = por %p106, %p107
      %p109 = scmp.ne.s32.totalorder %s100, %s101
      %p110 = scmp.eq.s32.totalorder %s27, 0
      %p111 = por %p109, %p110
      %p112 = scmp.ne.s32.totalorder %s100, %s101
      %p113 = scmp.eq.s32.totalorder %s28, 1
      %p114 = por %p112, %p113
      %p116 = scmp.ne.s32.totalorder %s101, %s115
      %p117 = scmp.eq.s32.totalorder %s28, 0
      %p118 = por %p116, %p117
      %s120 = sadd.s32 %s119, 1
      %p123 = scmp.eq.s32.totalorder %s22, 1
      %p124 = scmp.ne.s32.totalorder %s119, %s121
      %p125 = scmp.eq.s32.totalorder %s22, 0
      %p126 = por %p124, %p125
      %p127 = scmp.ne.s32.totalorder %s119, %s121
      %p128 = scmp.eq.s32.totalorder %s27, 1
      %p129 = por %p127, %p128
      %p130 = scmp.ne.s32.totalorder %s121, %s122
      %p131 = scmp.eq.s32.totalorder %s27, 0
      %p132 = por %p130, %p131
      %p133 = scmp.ne.s32.totalorder %s121, %s122
      %p134 = scmp.eq.s32.totalorder %s28, 1
      %p135 = por %p133, %p134
      %p137 = scmp.ne.s32.totalorder %s122, %s136
      %p138 = scmp.eq.s32.totalorder %s28, 0
      %p139 = por %p137, %p138
      %s141 = sadd.s32 %s140, 1
      %p144 = scmp.eq.s32.totalorder %s22, 1
      %p145 = scmp.ne.s32.totalorder %s140, %s142
      %p146 = scmp.eq.s32.totalorder %s22, 0
      %p147 = por %p145, %p146
      %p148 = scmp.ne.s32.totalorder %s140, %s142
      %p149 = scmp.eq.s32.totalorder %s27, 1
      %p150 = por %p148, %p149
      %p151 = scmp.ne.s32.totalorder %s142, %s143
      %p152 = scmp.eq.s32.totalorder %s27, 0
      %p153 = por %p151, %p152
      %p154 = scmp.ne.s32.totalorder %s142, %s143
      %p155 = scmp.eq.s32.totalorder %s28, 1
      %p156 = por %p154, %p155
      %p158 = scmp.ne.s32.totalorder %s143, %s157
      %p159 = scmp.eq.s32.totalorder %s28, 0
      %p160 = por %p158, %p159
      %s162 = sadd.s32 %s161, 1
      %p165 = scmp.eq.s32.totalorder %s22, 1
      %p166 = scmp.ne.s32.totalorder %s161, %s163
      %p167 = scmp.eq.s32.totalorder %s22, 0
      %p168 = por %p166, %p167
      %p169 = scmp.ne.s32.totalorder %s161, %s163
      %p170 = scmp.eq.s32.totalorder %s27, 1
      %p171 = por %p169, %p170
      %p172 = scmp.ne.s32.totalorder %s163, %s164
      %p173 = scmp.eq.s32.totalorder %s27, 0
      %p174 = por %p172, %p173
      %p175 = scmp.ne.s32.totalorder %s163, %s164
      %p176 = scmp.eq.s32.totalorder %s28, 1
      %p177 = por %p175, %p176
      %p179 = scmp.ne.s32.totalorder %s164, %s178
      %p180 = scmp.eq.s32.totalorder %s28, 0
      %p181 = por %p179, %p180
      %s183 = sadd.s32 %s182, 1
      %p186 = scmp.eq.s32.totalorder %s22, 1
      %p187 = scmp.ne.s32.totalorder %s182, %s184
      %p188 = scmp.eq.s32.totalorder %s22, 0
      %p189 = por %p187, %p188
      %p190 = scmp.ne.s32.totalorder %s182, %s184
      %p191 = scmp.eq.s32.totalorder %s27, 1
      %p192 = por %p190, %p191
      %p193 = scmp.ne.s32.totalorder %s184, %s185
      %p194 = scmp.eq.s32.totalorder %s27, 0
      %p195 = por %p193, %p194
      %p196 = scmp.ne.s32.totalorder %s184, %s185
      %p197 = scmp.eq.s32.totalorder %s28, 1
      %p198 = por %p196, %p197
      %p200 = scmp.ne.s32.totalorder %s185, %s199
      %p201 = scmp.eq.s32.totalorder %s28, 0
      %p202 = por %p200, %p201
      %s204 = sadd.s32 %s203, 1
      %p207 = scmp.eq.s32.totalorder %s22, 1
      %p208 = scmp.ne.s32.totalorder %s203, %s205
      %p209 = scmp.eq.s32.totalorder %s22, 0
      %p210 = por %p208, %p209
      %p211 = scmp.ne.s32.totalorder %s203, %s205
      %p212 = scmp.eq.s32.totalorder %s27, 1
      %p213 = por %p211, %p212
      %p214 = scmp.ne.s32.totalorder %s205, %s206
      %p215 = scmp.eq.s32.totalorder %s27, 0
      %p216 = por %p214, %p215
      %p217 = scmp.ne.s32.totalorder %s205, %s206
      %p218 = scmp.eq.s32.totalorder %s28, 1
      %p219 = por %p217, %p218
      %p221 = scmp.ne.s32.totalorder %s206, %s220
      %p222 = scmp.eq.s32.totalorder %s28, 0
      %p223 = por %p221, %p222
      %s225 = sadd.s32 %s224, 1
      %p228 = scmp.eq.s32.totalorder %s22, 1
      %p229 = scmp.ne.s32.totalorder %s224, %s226
      %p230 = scmp.eq.s32.totalorder %s22, 0
      %p231 = por %p229, %p230
      %p232 = scmp.ne.s32.totalorder %s224, %s226
      %p233 = scmp.eq.s32.totalorder %s27, 1
      %p234 = por %p232, %p233
      %p235 = scmp.ne.s32.totalorder %s226, %s227
      %p236 = scmp.eq.s32.totalorder %s27, 0
      %p237 = por %p235, %p236
      %p238 = scmp.ne.s32.totalorder %s226, %s227
      %p239 = scmp.eq.s32.totalorder %s28, 1
      %p240 = por %p238, %p239
      %p242 = scmp.ne.s32.totalorder %s227, %s241
      %p243 = scmp.eq.s32.totalorder %s28, 0
      %p244 = por %p242, %p243
      %s246 = sadd.s32 %s245, 1
      %p249 = scmp.eq.s32.totalorder %s22, 1
      %p250 = scmp.ne.s32.totalorder %s245, %s247
      %p251 = scmp.eq.s32.totalorder %s22, 0
      %p252 = por %p250, %p251
      %p253 = scmp.ne.s32.totalorder %s245, %s247
      %p254 = scmp.eq.s32.totalorder %s27, 1
      %p255 = por %p253, %p254
      %p256 = scmp.ne.s32.totalorder %s247, %s248
      %p257 = scmp.eq.s32.totalorder %s27, 0
      %p258 = por %p256, %p257
      %p259 = scmp.ne.s32.totalorder %s247, %s248
      %p260 = scmp.eq.s32.totalorder %s28, 1
      %p261 = por %p259, %p260
      %p263 = scmp.ne.s32.totalorder %s248, %s262
      %p264 = scmp.eq.s32.totalorder %s28, 0
      %p265 = por %p263, %p264
      %s267 = sadd.s32 %s266, 1
      %p270 = scmp.eq.s32.totalorder %s22, 1
      %p271 = scmp.ne.s32.totalorder %s266, %s268
      %p272 = scmp.eq.s32.totalorder %s22, 0
      %p273 = por %p271, %p272
      %p274 = scmp.ne.s32.totalorder %s266, %s268
      %p275 = scmp.eq.s32.totalorder %s27, 1
      %p276 = por %p274, %p275
      %p277 = scmp.ne.s32.totalorder %s268, %s269
      %p278 = scmp.eq.s32.totalorder %s27, 0
      %p279 = por %p277, %p278
      %p280 = scmp.ne.s32.totalorder %s268, %s269
      %p281 = scmp.eq.s32.totalorder %s28, 1
      %p282 = por %p280, %p281
      %p284 = scmp.ne.s32.totalorder %s269, %s283
      %p285 = scmp.eq.s32.totalorder %s28, 0
      %p286 = por %p284, %p285
      %s288 = sadd.s32 %s287, 1
      %p291 = scmp.eq.s32.totalorder %s22, 1
      %p292 = scmp.ne.s32.totalorder %s287, %s289
      %p293 = scmp.eq.s32.totalorder %s22, 0
      %p294 = por %p292, %p293
      %p295 = scmp.ne.s32.totalorder %s287, %s289
      %p296 = scmp.eq.s32.totalorder %s27, 1
      %p297 = por %p295, %p296
      %p298 = scmp.ne.s32.totalorder %s289, %s290
      %p299 = scmp.eq.s32.totalorder %s27, 0
      %p300 = por %p298, %p299
      %p301 = scmp.ne.s32.totalorder %s289, %s290
      %p302 = scmp.eq.s32.totalorder %s28, 1
      %p303 = por %p301, %p302
      %p305 = scmp.ne.s32.totalorder %s290, %s304
      %p306 = scmp.eq.s32.totalorder %s28, 0
      %p307 = por %p305, %p306
      %s308 = ssub.s32 %s22, %s29
      %p309 = scmp.eq.s32.totalorder %s308, 0
      %s311 = sadd.s32 %s310, 1
      %s312 = scalar_select %p309, %s310, %s311
      %p315 = pneg %p309
      %p316 = scmp.eq.s32.totalorder %s22, 1
      %p317 = por %p315, %p316
      %p318 = scmp.ne.s32.totalorder %s310, %s313
      %p319 = scmp.eq.s32.totalorder %s22, 0
      %p320 = por %p318, %p319
      %p321 = scmp.ne.s32.totalorder %s310, %s313
      %p322 = scmp.eq.s32.totalorder %s27, 1
      %p323 = por %p321, %p322
      %p324 = scmp.ne.s32.totalorder %s313, %s314
      %p325 = scmp.eq.s32.totalorder %s27, 0
      %p326 = por %p324, %p325
      %p327 = scmp.ne.s32.totalorder %s313, %s314
      %p328 = scmp.eq.s32.totalorder %s28, 1
      %p329 = por %p327, %p328
      %p331 = scmp.ne.s32.totalorder %s314, %s330
      %p332 = scmp.eq.s32.totalorder %s28, 0
      %p333 = por %p331, %p332
      %p334 = scmp.le.s32.totalorder 1, %s22
      %p335 = scmp.lt.s32.totalorder %s22, 3
      %p336 = pnand %p334, %p335
      %p337 = pneg %p336
      // Predicated region
      $region9: #{tpu_custom_call.1} parent=5 // pred_check
        _
      $region10: #{tpu_custom_call.1} parent=5 // pred_check_branch
        %339 = sbr.rel (%p336) target = $region12
      $region11: #{tpu_custom_call.1} parent=5 // pred_region
        %s340 = ssub.s32 %s22, 1
        // Predicated region
        $region13: #{tpu_custom_call.1} parent=11 // pred_check
          %p341 = pneg %p69
        $region14: #{tpu_custom_call.1} parent=11 // pred_check_branch
          %343 = sbr.rel (%p341) target = $region16
        $region15: #{tpu_custom_call.1} parent=11 // pred_region
          _
        $region16: #{tpu_custom_call.1} parent=11 // pred_fallthru
          _
        // Predicated region
        $region17: #{tpu_custom_call.1} parent=11 // pred_check
          %p344 = pneg %p90
        $region18: #{tpu_custom_call.1} parent=11 // pred_check_branch
          %346 = sbr.rel (%p344) target = $region20
        $region19: #{tpu_custom_call.1} parent=11 // pred_region
          _
        $region20: #{tpu_custom_call.1} parent=11 // pred_fallthru
          _
        // Predicated region
        $region21: #{tpu_custom_call.1} parent=11 // pred_check
          %p347 = pneg %p111
        $region22: #{tpu_custom_call.1} parent=11 // pred_check_branch
          %349 = sbr.rel (%p347) target = $region24
        $region23: #{tpu_custom_call.1} parent=11 // pred_region
          _
        $region24: #{tpu_custom_call.1} parent=11 // pred_fallthru
          _
        // Predicated region
        $region25: #{tpu_custom_call.1} parent=11 // pred_check
          %p350 = pneg %p132
        $region26: #{tpu_custom_call.1} parent=11 // pred_check_branch
          %352 = sbr.rel (%p350) target = $region28
        $region27: #{tpu_custom_call.1} parent=11 // pred_region
          _
        $region28: #{tpu_custom_call.1} parent=11 // pred_fallthru
          _
        // Predicated region
        $region29: #{tpu_custom_call.1} parent=11 // pred_check
          %p353 = pneg %p153
        $region30: #{tpu_custom_call.1} parent=11 // pred_check_branch
          %355 = sbr.rel (%p353) target = $region32
        $region31: #{tpu_custom_call.1} parent=11 // pred_region
          _
        $region32: #{tpu_custom_call.1} parent=11 // pred_fallthru
          _
        // Predicated region
        $region33: #{tpu_custom_call.1} parent=11 // pred_check
          %p356 = pneg %p174
        $region34: #{tpu_custom_call.1} parent=11 // pred_check_branch
          %358 = sbr.rel (%p356) target = $region36
        $region35: #{tpu_custom_call.1} parent=11 // pred_region
          _
        $region36: #{tpu_custom_call.1} parent=11 // pred_fallthru
          _
        // Predicated region
        $region37: #{tpu_custom_call.1} parent=11 // pred_check
          %p359 = pneg %p195
        $region38: #{tpu_custom_call.1} parent=11 // pred_check_branch
          %361 = sbr.rel (%p359) target = $region40
        $region39: #{tpu_custom_call.1} parent=11 // pred_region
          _
        $region40: #{tpu_custom_call.1} parent=11 // pred_fallthru
          _
        // Predicated region
        $region41: #{tpu_custom_call.1} parent=11 // pred_check
          %p362 = pneg %p216
        $region42: #{tpu_custom_call.1} parent=11 // pred_check_branch
          %364 = sbr.rel (%p362) target = $region44
        $region43: #{tpu_custom_call.1} parent=11 // pred_region
          _
        $region44: #{tpu_custom_call.1} parent=11 // pred_fallthru
          _
        // Predicated region
        $region45: #{tpu_custom_call.1} parent=11 // pred_check
          %p365 = pneg %p237
        $region46: #{tpu_custom_call.1} parent=11 // pred_check_branch
          %367 = sbr.rel (%p365) target = $region48
        $region47: #{tpu_custom_call.1} parent=11 // pred_region
          _
        $region48: #{tpu_custom_call.1} parent=11 // pred_fallthru
          _
        // Predicated region
        $region49: #{tpu_custom_call.1} parent=11 // pred_check
          %p368 = pneg %p258
        $region50: #{tpu_custom_call.1} parent=11 // pred_check_branch
          %370 = sbr.rel (%p368) target = $region52
        $region51: #{tpu_custom_call.1} parent=11 // pred_region
          _
        $region52: #{tpu_custom_call.1} parent=11 // pred_fallthru
          _
        // Predicated region
        $region53: #{tpu_custom_call.1} parent=11 // pred_check
          %p371 = pneg %p279
        $region54: #{tpu_custom_call.1} parent=11 // pred_check_branch
          %373 = sbr.rel (%p371) target = $region56
        $region55: #{tpu_custom_call.1} parent=11 // pred_region
          _
        $region56: #{tpu_custom_call.1} parent=11 // pred_fallthru
          _
        // Predicated region
        $region57: #{tpu_custom_call.1} parent=11 // pred_check
          %p374 = pneg %p300
        $region58: #{tpu_custom_call.1} parent=11 // pred_check_branch
          %376 = sbr.rel (%p374) target = $region60
        $region59: #{tpu_custom_call.1} parent=11 // pred_region
          _
        $region60: #{tpu_custom_call.1} parent=11 // pred_fallthru
          _
      $region12: #{tpu_custom_call.1} parent=5 // pred_fallthru
        _
      %p377 = scmp.lt.s32.totalorder %s22, 2
      // Predicated region
      $region61: #{tpu_custom_call.1} parent=5 // pred_check
        %p378 = pneg %p377
      $region62: #{tpu_custom_call.1} parent=5 // pred_check_branch
        %380 = sbr.rel (%p378) target = $region64
      $region63: #{tpu_custom_call.1} parent=5 // pred_region
        // Predicated region
        $region65: #{tpu_custom_call.1} parent=63 // pred_check
          %p381 = pneg %p42
        $region66: #{tpu_custom_call.1} parent=63 // pred_check_branch
          %383 = sbr.rel (%p381) target = $region68
        $region67: #{tpu_custom_call.1} parent=63 // pred_region
          %p384 = scmp.lt.s32.totalorder %s22, 1
          %s385 = scalar_select %p384, %s22, 1
          %s386 = smul.addr %s385, 8
          %s387 = scalar_lea.vmem %s0, %s386
        $region68: #{tpu_custom_call.1} parent=63 // pred_fallthru
          _
      $region64: #{tpu_custom_call.1} parent=5 // pred_fallthru
        _
      %p388 = scmp.le.s32.totalorder 1, %s22
      %p389 = scmp.lt.s32.totalorder %s22, 3
      %p390 = pnand %p388, %p389
      %p391 = pneg %p390
      // Predicated region
      $region69: #{tpu_custom_call.1} parent=5 // pred_check
        _
      $region70: #{tpu_custom_call.1} parent=5 // pred_check_branch
        %393 = sbr.rel (%p390) target = $region72
      $region71: #{tpu_custom_call.1} parent=5 // pred_region
        %s394 = ssub.s32 %s22, 1
        %p395 = scmp.lt.s32.totalorder %s27, 1
        %s396 = scalar_select %p395, %s27, 1
        %s397 = smul.addr %s396, 8
        %s398 = scalar_lea.vmem %s0, %s397
        %p399 = pneg %p48
        %p400 = pneg %p45
        %p401 = pneg %p69
        %p402 = pneg %p66
        %p403 = pneg %p90
        %p404 = pneg %p87
        %p405 = pneg %p111
        %p406 = pneg %p108
        %p407 = pneg %p132
        %p408 = pneg %p129
        %p409 = pneg %p153
        %p410 = pneg %p150
        %p411 = pneg %p174
        %p412 = pneg %p171
        %p413 = pneg %p195
        %p414 = pneg %p192
        %p415 = pneg %p216
        %p416 = pneg %p213
        %p417 = pneg %p237
        %p418 = pneg %p234
        %p419 = pneg %p258
        %p420 = pneg %p255
        %p421 = pneg %p279
        %p422 = pneg %p276
        %p423 = pneg %p300
        %p424 = pneg %p297
        %p425 = pneg %p326
        %p426 = pneg %p323
        %s427 = sand.u32 %s313, 1
        %s428 = scalar_lea.sflag [#allocation3], %s427
        %s429 = sand.u32 %s313, 1
        %s430 = smul.addr %s429, 8
        %s431 = scalar_lea.vmem [#allocation2], %s430
        %p432 = scmp.lt.s32.totalorder %s27, 1
        %s433 = scalar_select %p432, %s27, 1
        %s434 = smul.addr %s433, 8
        %s435 = scalar_lea.vmem %s0, %s434
        %v437 = vld [vmem:[%s435] sm:$0xff]
        %v438 = vld [vmem:[%s1] sm:$0x1]
        %v439 = vld [vmem:[%s2] sm:$0x1]
        %vm440 = vcmask 261120
        %v441 = vsel %vm440, %v437, 0.0
        %442 = vadd.xlane.f32.xlu0 %v441
        %v443 = vpop.xlane.xlu0 %442
        %v444 = vrcp.pop 32.0
        %v445 = vmul.f32 32.0, %v444
        %v446 = vsub.f32 1.0, %v445
        %v447 = vmul.f32 %v444, %v446
        %v448 = vadd.f32 %v444, %v447
        %vm449 = vweird.f32 %v444
        %v450 = vsel %vm449, %v444, %v448
        %v451 = vmul.f32 %v443, %v450
        %v452 = vsub.f32 %v437, %v451
        %v453 = vmul.f32 %v452, %v452
        %v454 = vsel %vm440, %v453, 0.0
        %455 = vadd.xlane.f32.xlu0 %v454
        %v456 = vpop.xlane.xlu0 %455
        %v457 = vmul.f32 %v456, %v450
        %v458 = vadd.f32 %v457, 1e-05
        %v459 = vrsqrt.pop %v458
        %v460 = vmul.f32 %v459, %v458
        %v461 = vmul.f32 %v460, %v459
        %v462 = vmul.f32 0.5, %v461
        %v463 = vsub.f32 1.5, %v462
        %v464 = vmul.f32 %v459, %v463
        %vm465 = vweird.f32 %v458
        %vm466 = vweird.f32 %v459
        %vm467 = vmor %vm465, %vm466
        %v468 = vsel %vm467, %v459, %v464
        %v469 = vmul.f32 %v452, %v468
        %v471 = vperm.slane %v438, 0
        %v473 = vmul.f32 %v469, %v471
        %v475 = vperm.slane %v439, 0
        %v477 = vadd.f32 %v473, %v475
        %v478 = vpack.c.bf16 %v477, %v477
        %v479 = vld [vmem:[%s3] sm:$0xf]
        %v480 = vld [vmem:[%s3 + $0x4] sm:$0xf]
        %v481 = vld [vmem:[%s3 + $0x8] sm:$0xf]
        %v482 = vld [vmem:[%s3 + $0xc] sm:$0xf]
        %v483 = vld [vmem:[%s4] sm:$0x1]
        %v485 = vperm.slane %v483, 0
        %v491 = vunpack.c.l.b16 %v479
        %v492 = vunpack.c.l.b16 %v480
        %v493 = vunpack.c.l.b16 %v481
        %v494 = vunpack.c.l.b16 %v482
        %v495 = vpack.c.b16 %v492, %v491
        %v496 = vpack.c.b16 %v494, %v493
        %v500 = vsel %vm440, %v478, 0
        %502 = vmatpush.bf16.msra.mxu0 0
        %503 = vmatpush.bf16.msra.mxu0 0
        %504 = vmatpush.bf16.msra.mxu0 0
        %505 = vmatpush.bf16.msra.mxu0 0
        %506 = vmatpush.bf16.msra.mxu0 0
        %507 = vmatpush.bf16.msra.mxu0 0
        %508 = vmatpush.bf16.msra.mxu0 %v496
        %509 = vmatpush.bf16.msra.mxu0 %v495
        %510 = vmatmul.bf16.gmra.mxu0 %v500
        %v511 = vpop.f32.mrf.mxu0
        %v512 = vadd.f32 %v485, %v511
        %v513 = vpop.f32.mrf.mxu0
        %514 = vdwg.mxu0
        %v515 = vpack.c.bf16 %v512, %v512
        %v516 = vlaneseq
        %v517 = vshrl.u32 %v516, 7
        %v518 = vlaneseq
        %v519 = vand.u32 %v518, 127
        %vm520 = vcmp.le.s32.totalorder %v519, %v517
        %v522 = vunpack.c.l.b16 %v515
        %v523 = vpack.c.b16 %v522, %v522
        %524 = vrot.lane.b32.xlu0 %v523, 96
        %v525 = vpop.permute.xlu0 %524
        %vm526 = vcmask 64512
        %v528 = vsel %vm526, %v515, 0
        %v531 = vsel %vm526, %v525, 0
        %533 = vmatpush.bf16.xpose.msra.mxu0 0
        %534 = vmatpush.bf16.xpose.msra.mxu0 0
        %535 = vmatpush.bf16.xpose.msra.mxu0 0
        %536 = vmatpush.bf16.xpose.msra.mxu0 0
        %537 = vmatpush.bf16.xpose.msra.mxu0 0
        %538 = vmatpush.bf16.xpose.msra.mxu0 0
        %539 = vmatpush.bf16.xpose.msra.mxu0 0
        %540 = vmatpush.bf16.xpose.msra.mxu0 %v531
        %541 = vmatmul.bf16.gmra.mxu0 %v528
        %v542 = vpop.f32.mrf.mxu0
        %v543 = vadd.f32 0.0, %v542
        %v544 = vpop.f32.mrf.mxu0
        %545 = vdwg.mxu0
        %v546 = vsel %vm520, %v543, -inf
        %v547 = vsel %vm526, %v546, -inf
        %548 = vmax.xlane.f32.xlu0 %v547
        %v549 = vpop.xlane.xlu0 %548
        %v550 = vsub.f32 %v546, %v549
        %v551 = vmul.f32 %v550, 1.442695
        %v552 = vpow.pop %v551
        %v553 = vsel %vm526, %v552, 0.0
        %554 = vadd.xlane.f32.xlu0 %v553
        %v555 = vpop.xlane.xlu0 %554
        %v556 = vpack.c.bf16 %v552, %v552
        %557 = vrot.lane.b32.xlu0 %v523, 64
        %v558 = vpop.permute.xlu0 %557
        %v560 = vsel %vm526, %v556, 0
        %vm562 = vcmask 1043456
        %v564 = vsel %vm562, %v558, 0
        %566 = vmatpush.bf16.msra.mxu0 0
        %567 = vmatpush.bf16.msra.mxu0 0
        %568 = vmatpush.bf16.msra.mxu0 0
        %569 = vmatpush.bf16.msra.mxu0 0
        %570 = vmatpush.bf16.msra.mxu0 0
        %571 = vmatpush.bf16.msra.mxu0 0
        %572 = vmatpush.bf16.msra.mxu0 0
        %573 = vmatpush.bf16.msra.mxu0 %v564
        %574 = vmatmul.bf16.gmra.mxu0 %v560
        %v575 = vpop.f32.mrf.mxu0
        %v576 = vadd.f32 0.0, %v575
        %v577 = vpop.f32.mrf.mxu0
        %578 = vdwg.mxu0
        %v579 = vrcp.pop %v555
        %v580 = vmul.f32 %v555, %v579
        %v581 = vsub.f32 1.0, %v580
        %v582 = vmul.f32 %v579, %v581
        %v583 = vadd.f32 %v579, %v582
        %vm584 = vweird.f32 %v555
        %vm585 = vweird.f32 %v579
        %vm586 = vmor %vm584, %vm585
        %v587 = vsel %vm586, %v579, %v583
        %v588 = vand.u32 2147483647, %v555
        %vm589 = vcmp.eq.f32.partialorder %v588, 8.507059e+37
        %v590 = vand.u32 %v555, 2147483648
        %v591 = vor.u32 1.1754944e-38, %v590
        %v592 = vsel %vm589, %v591, %v587
        %v593 = vmul.f32 1.0, %v592
        %v594 = vmul.f32 %v576, %v593
        %v595 = vpack.c.bf16 %v594, %v594
        %v596 = vld [vmem:[%s5] sm:$0xf]
        %597 = vrot.lane.b32.xlu0 %v523, 120
        %v598 = vpop.permute.xlu0 %597
        %599 = vrot.lane.b32.xlu0 %v523, 88
        %v600 = vpop.permute.xlu0 %599
        %v602 = vsel %vm526, %v598, 0
        %v605 = vsel %vm526, %v600, 0
        %607 = vmatpush.bf16.xpose.msra.mxu0 0
        %608 = vmatpush.bf16.xpose.msra.mxu0 0
        %609 = vmatpush.bf16.xpose.msra.mxu0 0
        %610 = vmatpush.bf16.xpose.msra.mxu0 0
        %611 = vmatpush.bf16.xpose.msra.mxu0 0
        %612 = vmatpush.bf16.xpose.msra.mxu0 0
        %613 = vmatpush.bf16.xpose.msra.mxu0 0
        %614 = vmatpush.bf16.xpose.msra.mxu0 %v605
        %615 = vmatmul.bf16.gmra.mxu0 %v602
        %v616 = vpop.f32.mrf.mxu0
        %v617 = vadd.f32 0.0, %v616
        %v618 = vpop.f32.mrf.mxu0
        %619 = vdwg.mxu0
        %v620 = vsel %vm520, %v617, -inf
        %v621 = vsel %vm526, %v620, -inf
        %622 = vmax.xlane.f32.xlu0 %v621
        %v623 = vpop.xlane.xlu0 %622
        %v624 = vsub.f32 %v620, %v623
        %v625 = vmul.f32 %v624, 1.442695
        %v626 = vpow.pop %v625
        %v627 = vsel %vm526, %v626, 0.0
        %628 = vadd.xlane.f32.xlu0 %v627
        %v629 = vpop.xlane.xlu0 %628
        %v630 = vpack.c.bf16 %v626, %v626
        %631 = vrot.lane.b32.xlu0 %v523, 56
        %v632 = vpop.permute.xlu0 %631
        %v634 = vsel %vm526, %v630, 0
        %v637 = vsel %vm562, %v632, 0
        %639 = vmatpush.bf16.msra.mxu0 0
        %640 = vmatpush.bf16.msra.mxu0 0
        %641 = vmatpush.bf16.msra.mxu0 0
        %642 = vmatpush.bf16.msra.mxu0 0
        %643 = vmatpush.bf16.msra.mxu0 0
        %644 = vmatpush.bf16.msra.mxu0 0
        %645 = vmatpush.bf16.msra.mxu0 0
        %646 = vmatpush.bf16.msra.mxu0 %v637
        %647 = vmatmul.bf16.gmra.mxu0 %v634
        %v648 = vpop.f32.mrf.mxu0
        %v649 = vadd.f32 0.0, %v648
        %v650 = vpop.f32.mrf.mxu0
        %651 = vdwg.mxu0
        %v652 = vrcp.pop %v629
        %v653 = vmul.f32 %v629, %v652
        %v654 = vsub.f32 1.0, %v653
        %v655 = vmul.f32 %v652, %v654
        %v656 = vadd.f32 %v652, %v655
        %vm657 = vweird.f32 %v629
        %vm658 = vweird.f32 %v652
        %vm659 = vmor %vm657, %vm658
        %v660 = vsel %vm659, %v652, %v656
        %v661 = vand.u32 2147483647, %v629
        %vm662 = vcmp.eq.f32.partialorder %v661, 8.507059e+37
        %v663 = vand.u32 %v629, 2147483648
        %v664 = vor.u32 1.1754944e-38, %v663
        %v665 = vsel %vm662, %v664, %v660
        %v666 = vmul.f32 1.0, %v665
        %v667 = vmul.f32 %v649, %v666
        %v668 = vpack.c.bf16 %v667, %v667
        %s669 = scalar_lea.vmem %s5, 4
        %v670 = vld [vmem:[%s669] sm:$0xf]
        %v672 = vsel %vm526, %v668, 0
        %v675 = vsel %vm562, %v670, 0
        %677 = vmatpush.bf16.msra.mxu0 0
        %678 = vmatpush.bf16.msra.mxu0 0
        %679 = vmatpush.bf16.msra.mxu0 0
        %680 = vmatpush.bf16.msra.mxu0 0
        %681 = vmatpush.bf16.msra.mxu0 0
        %682 = vmatpush.bf16.msra.mxu0 0
        %683 = vmatpush.bf16.msra.mxu0 0
        %684 = vmatpush.bf16.msra.mxu0 %v675
        %685 = vmatmul.bf16.gmra.mxu0 %v672
        %v686 = vpop.f32.mrf.mxu0
        %v687 = vadd.f32 0.0, %v686
        %v688 = vpop.f32.mrf.mxu0
        %689 = vdwg.mxu0
        %v691 = vsel %vm526, %v595, 0
        %v694 = vsel %vm562, %v596, 0
        %696 = vmatpush.bf16.msra.mxu0 0
        %697 = vmatpush.bf16.msra.mxu0 0
        %698 = vmatpush.bf16.msra.mxu0 0
        %699 = vmatpush.bf16.msra.mxu0 0
        %700 = vmatpush.bf16.msra.mxu0 0
        %701 = vmatpush.bf16.msra.mxu0 0
        %702 = vmatpush.bf16.msra.mxu0 0
        %703 = vmatpush.bf16.msra.mxu0 %v694
        %704 = vmatmul.bf16.gmra.mxu0 %v691
        %v705 = vpop.f32.mrf.mxu0
        %v706 = vadd.f32 %v687, %v705
        %v707 = vpop.f32.mrf.mxu0
        %708 = vdwg.mxu0
        %709 = vrot.lane.b32.xlu0 %v523, 112
        %v710 = vpop.permute.xlu0 %709
        %711 = vrot.lane.b32.xlu0 %v523, 80
        %v712 = vpop.permute.xlu0 %711
        %v714 = vsel %vm526, %v710, 0
        %v717 = vsel %vm526, %v712, 0
        %719 = vmatpush.bf16.xpose.msra.mxu0 0
        %720 = vmatpush.bf16.xpose.msra.mxu0 0
        %721 = vmatpush.bf16.xpose.msra.mxu0 0
        %722 = vmatpush.bf16.xpose.msra.mxu0 0
        %723 = vmatpush.bf16.xpose.msra.mxu0 0
        %724 = vmatpush.bf16.xpose.msra.mxu0 0
        %725 = vmatpush.bf16.xpose.msra.mxu0 0
        %726 = vmatpush.bf16.xpose.msra.mxu0 %v717
        %727 = vmatmul.bf16.gmra.mxu0 %v714
        %v728 = vpop.f32.mrf.mxu0
        %v729 = vadd.f32 0.0, %v728
        %v730 = vpop.f32.mrf.mxu0
        %731 = vdwg.mxu0
        %v732 = vsel %vm520, %v729, -inf
        %v733 = vsel %vm526, %v732, -inf
        %734 = vmax.xlane.f32.xlu0 %v733
        %v735 = vpop.xlane.xlu0 %734
        %v736 = vsub.f32 %v732, %v735
        %v737 = vmul.f32 %v736, 1.442695
        %v738 = vpow.pop %v737
        %v739 = vsel %vm526, %v738, 0.0
        %740 = vadd.xlane.f32.xlu0 %v739
        %v741 = vpop.xlane.xlu0 %740
        %v742 = vpack.c.bf16 %v738, %v738
        %743 = vrot.lane.b32.xlu0 %v523, 48
        %v744 = vpop.permute.xlu0 %743
        %v746 = vsel %vm526, %v742, 0
        %v749 = vsel %vm562, %v744, 0
        %751 = vmatpush.bf16.msra.mxu0 0
        %752 = vmatpush.bf16.msra.mxu0 0
        %753 = vmatpush.bf16.msra.mxu0 0
        %754 = vmatpush.bf16.msra.mxu0 0
        %755 = vmatpush.bf16.msra.mxu0 0
        %756 = vmatpush.bf16.msra.mxu0 0
        %757 = vmatpush.bf16.msra.mxu0 0
        %758 = vmatpush.bf16.msra.mxu0 %v749
        %759 = vmatmul.bf16.gmra.mxu0 %v746
        %v760 = vpop.f32.mrf.mxu0
        %v761 = vadd.f32 0.0, %v760
        %v762 = vpop.f32.mrf.mxu0
        %763 = vdwg.mxu0
        %v764 = vrcp.pop %v741
        %v765 = vmul.f32 %v741, %v764
        %v766 = vsub.f32 1.0, %v765
        %v767 = vmul.f32 %v764, %v766
        %v768 = vadd.f32 %v764, %v767
        %vm769 = vweird.f32 %v741
        %vm770 = vweird.f32 %v764
        %vm771 = vmor %vm769, %vm770
        %v772 = vsel %vm771, %v764, %v768
        %v773 = vand.u32 2147483647, %v741
        %vm774 = vcmp.eq.f32.partialorder %v773, 8.507059e+37
        %v775 = vand.u32 %v741, 2147483648
        %v776 = vor.u32 1.1754944e-38, %v775
        %v777 = vsel %vm774, %v776, %v772
        %v778 = vmul.f32 1.0, %v777
        %v779 = vmul.f32 %v761, %v778
        %v780 = vpack.c.bf16 %v779, %v779
        %s781 = scalar_lea.vmem %s5, 8
        %v782 = vld [vmem:[%s781] sm:$0xf]
        %v784 = vsel %vm526, %v780, 0
        %v787 = vsel %vm562, %v782, 0
        %789 = vmatpush.bf16.msra.mxu0 0
        %790 = vmatpush.bf16.msra.mxu0 0
        %791 = vmatpush.bf16.msra.mxu0 0
        %792 = vmatpush.bf16.msra.mxu0 0
        %793 = vmatpush.bf16.msra.mxu0 0
        %794 = vmatpush.bf16.msra.mxu0 0
        %795 = vmatpush.bf16.msra.mxu0 0
        %796 = vmatpush.bf16.msra.mxu0 %v787
        %797 = vmatmul.bf16.gmra.mxu0 %v784
        %v798 = vpop.f32.mrf.mxu0
        %v799 = vadd.f32 0.0, %v798
        %v800 = vpop.f32.mrf.mxu0
        %801 = vdwg.mxu0
        %v802 = vadd.f32 %v706, %v799
        %803 = vrot.lane.b32.xlu0 %v523, 104
        %v804 = vpop.permute.xlu0 %803
        %805 = vrot.lane.b32.xlu0 %v523, 72
        %v806 = vpop.permute.xlu0 %805
        %v808 = vsel %vm526, %v804, 0
        %v811 = vsel %vm526, %v806, 0
        %813 = vmatpush.bf16.xpose.msra.mxu0 0
        %814 = vmatpush.bf16.xpose.msra.mxu0 0
        %815 = vmatpush.bf16.xpose.msra.mxu0 0
        %816 = vmatpush.bf16.xpose.msra.mxu0 0
        %817 = vmatpush.bf16.xpose.msra.mxu0 0
        %818 = vmatpush.bf16.xpose.msra.mxu0 0
        %819 = vmatpush.bf16.xpose.msra.mxu0 0
        %820 = vmatpush.bf16.xpose.msra.mxu0 %v811
        %821 = vmatmul.bf16.gmra.mxu0 %v808
        %v822 = vpop.f32.mrf.mxu0
        %v823 = vadd.f32 0.0, %v822
        %v824 = vpop.f32.mrf.mxu0
        %825 = vdwg.mxu0
        %v826 = vsel %vm520, %v823, -inf
        %v827 = vsel %vm526, %v826, -inf
        %828 = vmax.xlane.f32.xlu0 %v827
        %v829 = vpop.xlane.xlu0 %828
        %v830 = vsub.f32 %v826, %v829
        %v831 = vmul.f32 %v830, 1.442695
        %v832 = vpow.pop %v831
        %v833 = vsel %vm526, %v832, 0.0
        %834 = vadd.xlane.f32.xlu0 %v833
        %v835 = vpop.xlane.xlu0 %834
        %v836 = vpack.c.bf16 %v832, %v832
        %837 = vrot.lane.b32.xlu0 %v523, 40
        %v838 = vpop.permute.xlu0 %837
        %v840 = vsel %vm526, %v836, 0
        %v843 = vsel %vm562, %v838, 0
        %845 = vmatpush.bf16.msra.mxu0 0
        %846 = vmatpush.bf16.msra.mxu0 0
        %847 = vmatpush.bf16.msra.mxu0 0
        %848 = vmatpush.bf16.msra.mxu0 0
        %849 = vmatpush.bf16.msra.mxu0 0
        %850 = vmatpush.bf16.msra.mxu0 0
        %851 = vmatpush.bf16.msra.mxu0 0
        %852 = vmatpush.bf16.msra.mxu0 %v843
        %853 = vmatmul.bf16.gmra.mxu0 %v840
        %v854 = vpop.f32.mrf.mxu0
        %v855 = vadd.f32 0.0, %v854
        %v856 = vpop.f32.mrf.mxu0
        %857 = vdwg.mxu0
        %v858 = vrcp.pop %v835
        %v859 = vmul.f32 %v835, %v858
        %v860 = vsub.f32 1.0, %v859
        %v861 = vmul.f32 %v858, %v860
        %v862 = vadd.f32 %v858, %v861
        %vm863 = vweird.f32 %v835
        %vm864 = vweird.f32 %v858
        %vm865 = vmor %vm863, %vm864
        %v866 = vsel %vm865, %v858, %v862
        %v867 = vand.u32 2147483647, %v835
        %vm868 = vcmp.eq.f32.partialorder %v867, 8.507059e+37
        %v869 = vand.u32 %v835, 2147483648
        %v870 = vor.u32 1.1754944e-38, %v869
        %v871 = vsel %vm868, %v870, %v866
        %v872 = vmul.f32 1.0, %v871
        %v873 = vmul.f32 %v855, %v872
        %v874 = vpack.c.bf16 %v873, %v873
        %s875 = scalar_lea.vmem %s5, 12
        %v876 = vld [vmem:[%s875] sm:$0xf]
        %v878 = vsel %vm526, %v874, 0
        %v881 = vsel %vm562, %v876, 0
        %883 = vmatpush.bf16.msra.mxu0 0
        %884 = vmatpush.bf16.msra.mxu0 0
        %885 = vmatpush.bf16.msra.mxu0 0
        %886 = vmatpush.bf16.msra.mxu0 0
        %887 = vmatpush.bf16.msra.mxu0 0
        %888 = vmatpush.bf16.msra.mxu0 0
        %889 = vmatpush.bf16.msra.mxu0 0
        %890 = vmatpush.bf16.msra.mxu0 %v881
        %891 = vmatmul.bf16.gmra.mxu0 %v878
        %v892 = vpop.f32.mrf.mxu0
        %v893 = vadd.f32 0.0, %v892
        %v894 = vpop.f32.mrf.mxu0
        %895 = vdwg.mxu0
        %v896 = vadd.f32 %v802, %v893
        %v897 = vld [vmem:[%s6] sm:$0x1]
        %v899 = vperm.slane %v897, 0
        %v901 = vadd.f32 %v896, %v899
        %v902 = vadd.f32 %v901, %v437
        %v903 = vld [vmem:[%s7] sm:$0x1]
        %v904 = vld [vmem:[%s8] sm:$0x1]
        %v905 = vsel %vm440, %v902, 0.0
        %906 = vadd.xlane.f32.xlu0 %v905
        %v907 = vpop.xlane.xlu0 %906
        %v908 = vmul.f32 %v907, %v450
        %v909 = vsub.f32 %v902, %v908
        %v910 = vmul.f32 %v909, %v909
        %v911 = vsel %vm440, %v910, 0.0
        %912 = vadd.xlane.f32.xlu0 %v911
        %v913 = vpop.xlane.xlu0 %912
        %v914 = vmul.f32 %v913, %v450
        %v915 = vadd.f32 %v914, 1e-05
        %v916 = vrsqrt.pop %v915
        %v917 = vmul.f32 %v916, %v915
        %v918 = vmul.f32 %v917, %v916
        %v919 = vmul.f32 0.5, %v918
        %v920 = vsub.f32 1.5, %v919
        %v921 = vmul.f32 %v916, %v920
        %vm922 = vweird.f32 %v915
        %vm923 = vweird.f32 %v916
        %vm924 = vmor %vm922, %vm923
        %v925 = vsel %vm924, %v916, %v921
        %v926 = vmul.f32 %v909, %v925
        %v928 = vperm.slane %v903, 0
        %v930 = vmul.f32 %v926, %v928
        %v932 = vperm.slane %v904, 0
        %v934 = vadd.f32 %v930, %v932
        %v935 = vpack.c.bf16 %v934, %v934
        %v936 = vld [vmem:[%s9] sm:$0xf]
        %v937 = vld [vmem:[%s9 + $0x4] sm:$0xf]
        %v938 = vld [vmem:[%s9 + $0x8] sm:$0xf]
        %v939 = vld [vmem:[%s9 + $0xc] sm:$0xf]
        %v940 = vld [vmem:[%s10] sm:$0x1]
        %v942 = vperm.slane %v940, 0
        %v948 = vunpack.c.l.b16 %v936
        %v949 = vunpack.c.l.b16 %v937
        %v950 = vunpack.c.l.b16 %v938
        %v951 = vunpack.c.l.b16 %v939
        %v952 = vpack.c.b16 %v949, %v948
        %v953 = vpack.c.b16 %v951, %v950
        %v957 = vsel %vm440, %v935, 0
        %959 = vmatpush.bf16.msra.mxu0 0
        %960 = vmatpush.bf16.msra.mxu0 0
        %961 = vmatpush.bf16.msra.mxu0 0
        %962 = vmatpush.bf16.msra.mxu0 0
        %963 = vmatpush.bf16.msra.mxu0 0
        %964 = vmatpush.bf16.msra.mxu0 0
        %965 = vmatpush.bf16.msra.mxu0 %v953
        %966 = vmatpush.bf16.msra.mxu0 %v952
        %967 = vmatmul.bf16.gmra.mxu0 %v957
        %v968 = vpop.f32.mrf.mxu0
        %v969 = vadd.f32 %v942, %v968
        %v970 = vpop.f32.mrf.mxu0
        %971 = vdwg.mxu0
        %v972 = vmul.f32 %v969, -1.702
        %v973 = vmul.f32 %v972, 1.442695
        %v974 = vpow.pop %v973
        %v975 = vadd.f32 %v974, 1.0
        %v976 = vrcp.pop %v975
        %v977 = vmul.f32 %v969, %v976
        %v978 = vpack.c.bf16 %v977, %v977
        %v979 = vld [vmem:[%s11] sm:$0xf]
        %v980 = vld [vmem:[%s11 + $0x4] sm:$0xf]
        %v981 = vld [vmem:[%s11 + $0x8] sm:$0xf]
        %v982 = vld [vmem:[%s11 + $0xc] sm:$0xf]
        %v983 = vld [vmem:[%s11 + $0x10] sm:$0xf]
        %v984 = vld [vmem:[%s11 + $0x14] sm:$0xf]
        %v985 = vld [vmem:[%s11 + $0x18] sm:$0xf]
        %v986 = vld [vmem:[%s11 + $0x1c] sm:$0xf]
        %v987 = vld [vmem:[%s11 + $0x20] sm:$0xf]
        %v988 = vld [vmem:[%s11 + $0x24] sm:$0xf]
        %v989 = vld [vmem:[%s11 + $0x28] sm:$0xf]
        %v990 = vld [vmem:[%s11 + $0x2c] sm:$0xf]
        %v991 = vld [vmem:[%s11 + $0x30] sm:$0xf]
        %v992 = vld [vmem:[%s11 + $0x34] sm:$0xf]
        %v993 = vld [vmem:[%s11 + $0x38] sm:$0xf]
        %v994 = vld [vmem:[%s11 + $0x3c] sm:$0xf]
        %v995 = vld [vmem:[%s12] sm:$0x1]
        %v997 = vperm.slane %v995, 0
        %v1015 = vunpack.c.l.b16 %v979
        %v1016 = vunpack.c.l.b16 %v980
        %v1017 = vunpack.c.l.b16 %v981
        %v1018 = vunpack.c.l.b16 %v982
        %v1019 = vunpack.c.l.b16 %v983
        %v1020 = vunpack.c.l.b16 %v984
        %v1021 = vunpack.c.l.b16 %v985
        %v1022 = vunpack.c.l.b16 %v986
        %v1023 = vunpack.c.l.b16 %v987
        %v1024 = vunpack.c.l.b16 %v988
        %v1025 = vunpack.c.l.b16 %v989
        %v1026 = vunpack.c.l.b16 %v990
        %v1027 = vunpack.c.l.b16 %v991
        %v1028 = vunpack.c.l.b16 %v992
        %v1029 = vunpack.c.l.b16 %v993
        %v1030 = vunpack.c.l.b16 %v994
        %v1031 = vpack.c.b16 %v1016, %v1015
        %v1032 = vpack.c.b16 %v1018, %v1017
        %v1033 = vpack.c.b16 %v1020, %v1019
        %v1034 = vpack.c.b16 %v1022, %v1021
        %v1035 = vpack.c.b16 %v1024, %v1023
        %v1036 = vpack.c.b16 %v1026, %v1025
        %v1037 = vpack.c.b16 %v1028, %v1027
        %v1038 = vpack.c.b16 %v1030, %v1029
        %1047 = vmatpush.bf16.msra.mxu0 %v1038
        %1048 = vmatpush.bf16.msra.mxu0 %v1037
        %1049 = vmatpush.bf16.msra.mxu0 %v1036
        %1050 = vmatpush.bf16.msra.mxu0 %v1035
        %1051 = vmatpush.bf16.msra.mxu0 %v1034
        %1052 = vmatpush.bf16.msra.mxu0 %v1033
        %1053 = vmatpush.bf16.msra.mxu0 %v1032
        %1054 = vmatpush.bf16.msra.mxu0 %v1031
        %1055 = vmatmul.bf16.gmra.mxu0 %v978
        %v1056 = vpop.f32.mrf.mxu0
        %v1057 = vadd.f32 %v997, %v1056
        %v1058 = vpop.f32.mrf.mxu0
        %1059 = vdwg.mxu0
        %v1060 = vadd.f32 %v1057, %v902
        %1061 = vst.msk [vmem:[%s431] sm:$0xff] %vm440, %v1060
        %s1062 = sand.u32 %s313, 1
        %s1063 = scalar_lea.sflag [#allocation3], %s1062
        %s1064 = sand.u32 %s313, 1
        %s1065 = smul.addr %s1064, 8
        %s1066 = scalar_lea.vmem [#allocation2], %s1065
        // Predicated region
        $region73: #{tpu_custom_call.1} parent=71 // pred_check
          %p1067 = pneg %p323
        $region74: #{tpu_custom_call.1} parent=71 // pred_check_branch
          %1069 = sbr.rel (%p1067) target = $region76
        $region75: #{tpu_custom_call.1} parent=71 // pred_region
          %1071 = vsyncadd %s1063, 0
          %s1072 = smul.addr %s27, 8
          %s1073 = scalar_lea.hbm %s13, %s1072
          %s1075 = sshll.u32 %s1066, 4
          %s1076 = int_to_ptr.vmem [resolvable:$true] %s1075
          %s1077 = sshll.u32 %s1073, 4
          %s1078 = int_to_ptr.hbm [resolvable:$true] %s1077
          %1080 = dma.vmem_to_hbm [thread:$0]  %s1076, 128, %s1078, %s1063
        $region76: #{tpu_custom_call.1} parent=71 // pred_fallthru
          _
      $region72: #{tpu_custom_call.1} parent=5 // pred_fallthru
        _
      %p1081 = scmp.le.s32.totalorder 2, %s22
      // Predicated region
      $region77: #{tpu_custom_call.1} parent=5 // pred_check
        %p1082 = pneg %p1081
      $region78: #{tpu_custom_call.1} parent=5 // pred_check_branch
        %1084 = sbr.rel (%p1082) target = $region80
      $region79: #{tpu_custom_call.1} parent=5 // pred_region
        %s1085 = ssub.s32 %s22, 2
        // Predicated region
        $region81: #{tpu_custom_call.1} parent=79 // pred_check
          %p1086 = pneg %p329
        $region82: #{tpu_custom_call.1} parent=79 // pred_check_branch
          %1088 = sbr.rel (%p1086) target = $region84
        $region83: #{tpu_custom_call.1} parent=79 // pred_region
          %s1089 = sand.u32 %s314, 1
          %s1090 = scalar_lea.sflag [#allocation3], %s1089
          %s1091 = sand.u32 %s314, 1
          %s1092 = smul.addr %s1091, 8
          %s1093 = scalar_lea.vmem [#allocation2], %s1092
          %1095 = dma.done %s1090, 128
        $region84: #{tpu_custom_call.1} parent=79 // pred_fallthru
          _
      $region80: #{tpu_custom_call.1} parent=5 // pred_fallthru
        _
    $region6: #{tpu_custom_call.1} parent=1 // loop_footer
      %s26 = sadd.s32 1, %s22
    $region7: #{tpu_custom_call.1} parent=1 // loop_footer_branch
      %21 = sbr.rel target = $region3
    $region8: #{tpu_custom_call.1} parent=1 // loop_exit
      _
    %1096 = vsyncpa [#allocation3], 1
    %s1097 = scalar_lea.sflag [#allocation3], 1
    %1098 = vsyncpa %s1097, 1

</llo_original>
